<compile_context>
chip_gen: v7x
topology: tpu7x:2x2x1
jax: 0.10.0
libtpu: 0.0.40
codegen_flags: <defaults>
</compile_context>

<pallas_src>
import functools

import jax
import jax.numpy as jnp
import numpy as np
from jax import lax
from jax.experimental import pallas as pl
from jax.experimental.pallas import tpu as pltpu

NEG_SLOPE = 0.01  # nn.LeakyReLU() default negative_slope


def _reflect(i, n):
    """ReflectionPad2d source index for (possibly out-of-range) index i. Static python."""
    if i < 0:
        return -i
    if i >= n:
        return 2 * (n - 1) - i
    return i


# ----------------------------- Pallas kernel --------------------------------
def _convd_fused_kernel(x_ref, w_ref, b_ref, o_ref, xflat_ref, xs_ref, y_ref, *,
                        K, pad, H, W, Hp, Wp, Ho, Wo, Cin, Cin_p):
    """Fused reflection-pad + conv (stride 1) + bias + LeakyReLU for one NCHW image.

    x_ref    : (1, Cin, H, W)        raw (unpadded) image, f32
    w_ref    : (Cout, K*K*Cin_p)     tap-major weight (zero-padded channels), f32
    b_ref    : (Cout, 1)             bias, f32
    o_ref    : (1, Cout, Ho*Wo)      lane-dense compacted output (bf16 by default)
    xflat_ref: (Cin_p, Hp*Wp + K-1)  VMEM scratch: reflection-padded flat image
    xs_ref   : (K*K*Cin_p, Ho*Wp)    VMEM scratch: stacked tap operand (one big dot)
    y_ref    : (Cout, Ho*Wp)         VMEM scratch: epilogue result incl. junk cols
    """
    L = Ho * Wp

    # -- 1) Reflection-padded, spatially flattened image in VMEM. ---------------
    # Zero first so the padded channel rows (Cin..Cin_p) and the K-1 flat tail are
    # deterministic zeros (they only meet zero weight columns / junk output cols).
    xflat_ref[...] = jnp.zeros_like(xflat_ref)
    for r in range(Hp):                                   # Hp static -> unrolled
        s = _reflect(r - pad, H)                          # source row (reflect)
        base = r * Wp
        xflat_ref[0:Cin, base + pad:base + pad + W] = x_ref[0, :, s, :]   # interior
        for j in range(pad):                              # reflected border columns
            lsrc = _reflect(j - pad, W)                   # = pad - j
            rsrc = _reflect(W + j, W)                     # = W - 2 - j
            xflat_ref[0:Cin, base + j:base + j + 1] = x_ref[0, :, s, lsrc:lsrc + 1]
            xflat_ref[0:Cin, base + pad + W + j:base + pad + W + j + 1] = \
                x_ref[0, :, s, rsrc:rsrc + 1]

    # -- 2) Stack the K*K taps (contiguous flat slices at static offsets). ------
    for kh in range(K):
        for kw in range(K):
            t = kh * K + kw
            d = kh * Wp + kw                              # static flat tap offset
            xs_ref[t * Cin_p:(t + 1) * Cin_p, :] = xflat_ref[:, d:d + L]

    # -- 3) ONE MXU contraction (depth K*K*Cin_p) for the whole image. ----------
    acc = jnp.dot(w_ref[...], xs_ref[...],
                  preferred_element_type=jnp.float32)     # (Cout, L) f32

    # -- 4) Bias + LeakyReLU epilogue in f32 (v5e-safe). -------------------------
    y = acc + b_ref[...]                                  # (Cout, 1) broadcast
    y_ref[...] = jnp.where(y >= 0, y, NEG_SLOPE * y)

    # -- 5) Compact away the K-1 junk columns per row; write lane-dense output. --
    for ho in range(Ho):
        o_ref[0, :, ho * Wo:(ho + 1) * Wo] = \
            y_ref[:, ho * Wp:ho * Wp + Wo].astype(o_ref.dtype)


# ------------------------------ convd wrapper --------------------------------
def convd_forward(x, weight, bias, *, kernel_size, stride,
                  out_dtype=jnp.bfloat16):
    """x: (B, Cin, H, W) NCHW.  weight: (Cout, Cin, K, K).  bias: (Cout,).

    Returns (B, Cout, Ho, Wo) in `out_dtype` (bf16 by default; f32 accumulation
    in-kernel, narrowed only at the final store)."""
    B, Cin, H, W = x.shape
    Cout, Cin_w, K, K2 = weight.shape
    assert K == kernel_size and K2 == K and Cin_w == Cin
    pad = K // 2
    Hp, Wp = H + 2 * pad, W + 2 * pad
    Ho, Wo = Hp - K + 1, Wp - K + 1                 # stride-1 output extent (== H, W)
    L = Ho * Wp                                     # flat row length incl. junk cols
    S_pad = Hp * Wp + (K - 1)                       # flat image + tap-overrun tail
    Cin_p = -(-Cin // 8) * 8                        # sublane-pad channels (f32 tile)

    # Tap-major weight: w2[o, (kh*K+kw)*Cin_p + c] = weight[o, c, kh, kw]; zeros in
    # the padded-channel slots.  (For real Wavemix sizes, Cout should be a multiple
    # of 8 — ideally 128/256 — for full MXU efficiency.)  Tiny one-time prep.
    w2 = jnp.transpose(weight, (0, 2, 3, 1))                       # (Cout, K, K, Cin)
    w2 = jnp.pad(w2, ((0, 0), (0, 0), (0, 0), (0, Cin_p - Cin)))
    w2 = w2.reshape(Cout, K * K * Cin_p).astype(jnp.float32)
    b2 = bias.reshape(Cout, 1).astype(jnp.float32)
    x = x.astype(jnp.float32)

    kernel = functools.partial(
        _convd_fused_kernel, K=K, pad=pad, H=H, W=W, Hp=Hp, Wp=Wp,
        Ho=Ho, Wo=Wo, Cin=Cin, Cin_p=Cin_p)

    out_flat = pl.pallas_call(
        kernel,
        out_shape=jax.ShapeDtypeStruct((B, Cout, Ho * Wo), out_dtype),
        grid_spec=pltpu.PrefetchScalarGridSpec(
            num_scalar_prefetch=0,
            grid=(B,),
            in_specs=[
                pl.BlockSpec((1, Cin, H, W), lambda b: (b, 0, 0, 0)),
                pl.BlockSpec((Cout, K * K * Cin_p), lambda b: (0, 0)),
                pl.BlockSpec((Cout, 1), lambda b: (0, 0)),
            ],
            out_specs=pl.BlockSpec((1, Cout, Ho * Wo), lambda b: (b, 0, 0)),
            scratch_shapes=[
                pltpu.VMEM((Cin_p, S_pad), jnp.float32),          # padded flat image
                pltpu.VMEM((K * K * Cin_p, L), jnp.float32),       # stacked tap operand
                pltpu.VMEM((Cout, L), jnp.float32),                # epilogue result
            ],
        ),
        compiler_params=pltpu.CompilerParams(
            dimension_semantics=("parallel",)),
    )(x, w2, b2)

    out = out_flat.reshape(B, Cout, Ho, Wo)         # free row-major split, no slice pass
    if stride > 1:
        # TODO(synk): implement strided taps in-kernel; Wavemix uses stride=1, so this
        #             subsample fallback is correct but wasteful for strided configs.
        Ho_s = (Hp - K) // stride + 1
        Wo_s = (Wp - K) // stride + 1
        out = out[:, :, ::stride, ::stride][:, :, :Ho_s, :Wo_s]
    return out


# ----------------------------- pure-JAX reference ----------------------------
def convd_reference(x, weight, bias, *, kernel_size, stride):
    pad = kernel_size // 2
    x_pad = x
    if pad:
        x_pad = jnp.pad(x, ((0, 0), (0, 0), (pad, pad), (pad, pad)), mode="reflect")
    y = lax.conv_general_dilated(
        x_pad, weight, window_strides=(stride, stride), padding="VALID",
        dimension_numbers=("NCHW", "OIHW", "NCHW"))
    y = y + bias.reshape(1, -1, 1, 1)
    return jnp.where(y >= 0, y, NEG_SLOPE * y)


# ---------------------------------- main -------------------------------------
if __name__ == "__main__":
    # Shapes consistent with convd(inputchannel=4, outchannel=8, kernel_size=3, stride=1)
    B, Cin, H, W = 2, 4, 16, 16
    Cout, K, stride = 8, 3, 1

    key = jax.random.PRNGKey(0)
    kx, kwt, kb = jax.random.split(key, 3)
    x = jax.random.normal(kx, (B, Cin, H, W), dtype=jnp.float32)
    # Deterministic, PyTorch-shaped parameter init (synthetic, not a checkpoint load).
    fan_in = Cin * K * K
    bound = 1.0 / np.sqrt(fan_in)
    weight = jax.random.uniform(kwt, (Cout, Cin, K, K), jnp.float32, -bound, bound)
    bias = jax.random.uniform(kb, (Cout,), jnp.float32, -bound, bound)

    fwd = jax.jit(functools.partial(convd_forward, kernel_size=K, stride=stride))
    out = jax.block_until_ready(fwd(x, weight, bias))

    ref = convd_reference(x, weight, bias, kernel_size=K, stride=stride)
    assert out.shape == ref.shape == (B, Cout, H, W), (out.shape, ref.shape)
    # f32 MXU accumulation but default-precision matmul + bf16 output store ->
    # compare against the f32 reference with a correspondingly loose tolerance.
    np.testing.assert_allclose(np.asarray(out.astype(jnp.float32)), np.asarray(ref),
                               rtol=3e-2, atol=3e-2)
    print("KERNEL_OK")
</pallas_src>

<mosaic_0001>
module attributes {stable_mosaic.version = 11 : i64} {
  func.func @_convd_fused_kernel(%arg0: i32, %arg1: memref<1x4x16x16xf32, #tpu.memory_space<vmem>>, %arg2: memref<8x72xf32, #tpu.memory_space<vmem>>, %arg3: memref<8x1xf32, #tpu.memory_space<vmem>>, %arg4: memref<1x8x256xbf16, #tpu.memory_space<vmem>>, %arg5: memref<8x326xf32, #tpu.memory_space<vmem>>, %arg6: memref<72x288xf32, #tpu.memory_space<vmem>>, %arg7: memref<8x288xf32, #tpu.memory_space<vmem>>) attributes {dimension_semantics = [#tpu.dimension_semantics<parallel>], iteration_bounds = array<i64: 2>, scalar_prefetch = 0 : i64, scratch_operands = 3 : i64, tpu.core_type = #tpu.core_type<tc>, window_params = [{transform_indices = @transform_0, window_bounds = array<i64: 1, 4, 16, 16>}, {pipeline_mode = #tpu.pipeline_mode<synchronous>, transform_indices = @transform_1, window_bounds = array<i64: 8, 72>}, {pipeline_mode = #tpu.pipeline_mode<synchronous>, transform_indices = @transform_2, window_bounds = array<i64: 8, 1>}, {transform_indices = @transform_3, window_bounds = array<i64: 1, 8, 256>}]} {
    %cst = arith.constant 0.000000e+00 : f32
    %0 = vector.broadcast %cst : f32 to vector<8x326xf32>
    %c0 = arith.constant 0 : index
    %c0_0 = arith.constant 0 : index
    %1 = vector.load %arg5[%c0, %c0_0] : memref<8x326xf32, #tpu.memory_space<vmem>>, vector<8x326xf32>
    tpu.vector_store %arg5[%c0, %c0_0], %0 {strides = array<i32>} : memref<8x326xf32, #tpu.memory_space<vmem>>, vector<8x326xf32>,
    %c0_1 = arith.constant 0 : index
    %c0_2 = arith.constant 0 : index
    %c1 = arith.constant 1 : index
    %c0_3 = arith.constant 0 : index
    %2 = vector.load %arg1[%c0_1, %c0_2, %c1, %c0_3] : memref<1x4x16x16xf32, #tpu.memory_space<vmem>>, vector<1x4x1x16xf32>
    %3 = vector.shape_cast %2 : vector<1x4x1x16xf32> to vector<4x16xf32>
    %c0_4 = arith.constant 0 : index
    %c1_5 = arith.constant 1 : index
    %4 = vector.load %arg5[%c0_4, %c1_5] : memref<8x326xf32, #tpu.memory_space<vmem>>, vector<4x16xf32>
    tpu.vector_store %arg5[%c0_4, %c1_5], %3 {strides = array<i32>} : memref<8x326xf32, #tpu.memory_space<vmem>>, vector<4x16xf32>,
    %c0_6 = arith.constant 0 : index
    %c0_7 = arith.constant 0 : index
    %c1_8 = arith.constant 1 : index
    %c1_9 = arith.constant 1 : index
    %5 = vector.load %arg1[%c0_6, %c0_7, %c1_8, %c1_9] : memref<1x4x16x16xf32, #tpu.memory_space<vmem>>, vector<1x4x1x1xf32>
    %6 = vector.shape_cast %5 : vector<1x4x1x1xf32> to vector<4x1xf32>
    %c0_10 = arith.constant 0 : index
    %c0_11 = arith.constant 0 : index
    %7 = vector.load %arg5[%c0_10, %c0_11] : memref<8x326xf32, #tpu.memory_space<vmem>>, vector<4x1xf32>
    tpu.vector_store %arg5[%c0_10, %c0_11], %6 {strides = array<i32>} : memref<8x326xf32, #tpu.memory_space<vmem>>, vector<4x1xf32>,
    %c0_12 = arith.constant 0 : index
    %c0_13 = arith.constant 0 : index
    %c1_14 = arith.constant 1 : index
    %c14 = arith.constant 14 : index
    %8 = vector.load %arg1[%c0_12, %c0_13, %c1_14, %c14] : memref<1x4x16x16xf32, #tpu.memory_space<vmem>>, vector<1x4x1x1xf32>
    %9 = vector.shape_cast %8 : vector<1x4x1x1xf32> to vector<4x1xf32>
    %c0_15 = arith.constant 0 : index
    %c17 = arith.constant 17 : index
    %10 = vector.load %arg5[%c0_15, %c17] : memref<8x326xf32, #tpu.memory_space<vmem>>, vector<4x1xf32>
    tpu.vector_store %arg5[%c0_15, %c17], %9 {strides = array<i32>} : memref<8x326xf32, #tpu.memory_space<vmem>>, vector<4x1xf32>,
    %c0_16 = arith.constant 0 : index
    %c0_17 = arith.constant 0 : index
    %c0_18 = arith.constant 0 : index
    %c0_19 = arith.constant 0 : index
    %11 = vector.load %arg1[%c0_16, %c0_17, %c0_18, %c0_19] : memref<1x4x16x16xf32, #tpu.memory_space<vmem>>, vector<1x4x1x16xf32>
    %12 = vector.shape_cast %11 : vector<1x4x1x16xf32> to vector<4x16xf32>
    %c0_20 = arith.constant 0 : index
    %c19 = arith.constant 19 : index
    %13 = vector.load %arg5[%c0_20, %c19] : memref<8x326xf32, #tpu.memory_space<vmem>>, vector<4x16xf32>
    tpu.vector_store %arg5[%c0_20, %c19], %12 {strides = array<i32>} : memref<8x326xf32, #tpu.memory_space<vmem>>, vector<4x16xf32>,
    %c0_21 = arith.constant 0 : index
    %c0_22 = arith.constant 0 : index
    %c0_23 = arith.constant 0 : index
    %c1_24 = arith.constant 1 : index
    %14 = vector.load %arg1[%c0_21, %c0_22, %c0_23, %c1_24] : memref<1x4x16x16xf32, #tpu.memory_space<vmem>>, vector<1x4x1x1xf32>
    %15 = vector.shape_cast %14 : vector<1x4x1x1xf32> to vector<4x1xf32>
    %c0_25 = arith.constant 0 : index
    %c18 = arith.constant 18 : index
    %16 = vector.load %arg5[%c0_25, %c18] : memref<8x326xf32, #tpu.memory_space<vmem>>, vector<4x1xf32>
    tpu.vector_store %arg5[%c0_25, %c18], %15 {strides = array<i32>} : memref<8x326xf32, #tpu.memory_space<vmem>>, vector<4x1xf32>,
    %c0_26 = arith.constant 0 : index
    %c0_27 = arith.constant 0 : index
    %c0_28 = arith.constant 0 : index
    %c14_29 = arith.constant 14 : index
    %17 = vector.load %arg1[%c0_26, %c0_27, %c0_28, %c14_29] : memref<1x4x16x16xf32, #tpu.memory_space<vmem>>, vector<1x4x1x1xf32>
    %18 = vector.shape_cast %17 : vector<1x4x1x1xf32> to vector<4x1xf32>
    %c0_30 = arith.constant 0 : index
    %c35 = arith.constant 35 : index
    %19 = vector.load %arg5[%c0_30, %c35] : memref<8x326xf32, #tpu.memory_space<vmem>>, vector<4x1xf32>
    tpu.vector_store %arg5[%c0_30, %c35], %18 {strides = array<i32>} : memref<8x326xf32, #tpu.memory_space<vmem>>, vector<4x1xf32>,
    %c0_31 = arith.constant 0 : index
    %c0_32 = arith.constant 0 : index
    %c1_33 = arith.constant 1 : index
    %c0_34 = arith.constant 0 : index
    %20 = vector.load %arg1[%c0_31, %c0_32, %c1_33, %c0_34] : memref<1x4x16x16xf32, #tpu.memory_space<vmem>>, vector<1x4x1x16xf32>
    %21 = vector.shape_cast %20 : vector<1x4x1x16xf32> to vector<4x16xf32>
    %c0_35 = arith.constant 0 : index
    %c37 = arith.constant 37 : index
    %22 = vector.load %arg5[%c0_35, %c37] : memref<8x326xf32, #tpu.memory_space<vmem>>, vector<4x16xf32>
    tpu.vector_store %arg5[%c0_35, %c37], %21 {strides = array<i32>} : memref<8x326xf32, #tpu.memory_space<vmem>>, vector<4x16xf32>,
    %c0_36 = arith.constant 0 : index
    %c0_37 = arith.constant 0 : index
    %c1_38 = arith.constant 1 : index
    %c1_39 = arith.constant 1 : index
    %23 = vector.load %arg1[%c0_36, %c0_37, %c1_38, %c1_39] : memref<1x4x16x16xf32, #tpu.memory_space<vmem>>, vector<1x4x1x1xf32>
    %24 = vector.shape_cast %23 : vector<1x4x1x1xf32> to vector<4x1xf32>
    %c0_40 = arith.constant 0 : index
    %c36 = arith.constant 36 : index
    %25 = vector.load %arg5[%c0_40, %c36] : memref<8x326xf32, #tpu.memory_space<vmem>>, vector<4x1xf32>
    tpu.vector_store %arg5[%c0_40, %c36], %24 {strides = array<i32>} : memref<8x326xf32, #tpu.memory_space<vmem>>, vector<4x1xf32>,
    %c0_41 = arith.constant 0 : index
    %c0_42 = arith.constant 0 : index
    %c1_43 = arith.constant 1 : index
    %c14_44 = arith.constant 14 : index
    %26 = vector.load %arg1[%c0_41, %c0_42, %c1_43, %c14_44] : memref<1x4x16x16xf32, #tpu.memory_space<vmem>>, vector<1x4x1x1xf32>
    %27 = vector.shape_cast %26 : vector<1x4x1x1xf32> to vector<4x1xf32>
    %c0_45 = arith.constant 0 : index
    %c53 = arith.constant 53 : index
    %28 = vector.load %arg5[%c0_45, %c53] : memref<8x326xf32, #tpu.memory_space<vmem>>, vector<4x1xf32>
    tpu.vector_store %arg5[%c0_45, %c53], %27 {strides = array<i32>} : memref<8x326xf32, #tpu.memory_space<vmem>>, vector<4x1xf32>,
    %c0_46 = arith.constant 0 : index
    %c0_47 = arith.constant 0 : index
    %c2 = arith.constant 2 : index
    %c0_48 = arith.constant 0 : index
    %29 = vector.load %arg1[%c0_46, %c0_47, %c2, %c0_48] : memref<1x4x16x16xf32, #tpu.memory_space<vmem>>, vector<1x4x1x16xf32>
    %30 = vector.shape_cast %29 : vector<1x4x1x16xf32> to vector<4x16xf32>
    %c0_49 = arith.constant 0 : index
    %c55 = arith.constant 55 : index
    %31 = vector.load %arg5[%c0_49, %c55] : memref<8x326xf32, #tpu.memory_space<vmem>>, vector<4x16xf32>
    tpu.vector_store %arg5[%c0_49, %c55], %30 {strides = array<i32>} : memref<8x326xf32, #tpu.memory_space<vmem>>, vector<4x16xf32>,
    %c0_50 = arith.constant 0 : index
    %c0_51 = arith.constant 0 : index
    %c2_52 = arith.constant 2 : index
    %c1_53 = arith.constant 1 : index
    %32 = vector.load %arg1[%c0_50, %c0_51, %c2_52, %c1_53] : memref<1x4x16x16xf32, #tpu.memory_space<vmem>>, vector<1x4x1x1xf32>
    %33 = vector.shape_cast %32 : vector<1x4x1x1xf32> to vector<4x1xf32>
    %c0_54 = arith.constant 0 : index
    %c54 = arith.constant 54 : index
    %34 = vector.load %arg5[%c0_54, %c54] : memref<8x326xf32, #tpu.memory_space<vmem>>, vector<4x1xf32>
    tpu.vector_store %arg5[%c0_54, %c54], %33 {strides = array<i32>} : memref<8x326xf32, #tpu.memory_space<vmem>>, vector<4x1xf32>,
    %c0_55 = arith.constant 0 : index
    %c0_56 = arith.constant 0 : index
    %c2_57 = arith.constant 2 : index
    %c14_58 = arith.constant 14 : index
    %35 = vector.load %arg1[%c0_55, %c0_56, %c2_57, %c14_58] : memref<1x4x16x16xf32, #tpu.memory_space<vmem>>, vector<1x4x1x1xf32>
    %36 = vector.shape_cast %35 : vector<1x4x1x1xf32> to vector<4x1xf32>
    %c0_59 = arith.constant 0 : index
    %c71 = arith.constant 71 : index
    %37 = vector.load %arg5[%c0_59, %c71] : memref<8x326xf32, #tpu.memory_space<vmem>>, vector<4x1xf32>
    tpu.vector_store %arg5[%c0_59, %c71], %36 {strides = array<i32>} : memref<8x326xf32, #tpu.memory_space<vmem>>, vector<4x1xf32>,
    %c0_60 = arith.constant 0 : index
    %c0_61 = arith.constant 0 : index
    %c3 = arith.constant 3 : index
    %c0_62 = arith.constant 0 : index
    %38 = vector.load %arg1[%c0_60, %c0_61, %c3, %c0_62] : memref<1x4x16x16xf32, #tpu.memory_space<vmem>>, vector<1x4x1x16xf32>
    %39 = vector.shape_cast %38 : vector<1x4x1x16xf32> to vector<4x16xf32>
    %c0_63 = arith.constant 0 : index
    %c73 = arith.constant 73 : index
    %40 = vector.load %arg5[%c0_63, %c73] : memref<8x326xf32, #tpu.memory_space<vmem>>, vector<4x16xf32>
    tpu.vector_store %arg5[%c0_63, %c73], %39 {strides = array<i32>} : memref<8x326xf32, #tpu.memory_space<vmem>>, vector<4x16xf32>,
    %c0_64 = arith.constant 0 : index
    %c0_65 = arith.constant 0 : index
    %c3_66 = arith.constant 3 : index
    %c1_67 = arith.constant 1 : index
    %41 = vector.load %arg1[%c0_64, %c0_65, %c3_66, %c1_67] : memref<1x4x16x16xf32, #tpu.memory_space<vmem>>, vector<1x4x1x1xf32>
    %42 = vector.shape_cast %41 : vector<1x4x1x1xf32> to vector<4x1xf32>
    %c0_68 = arith.constant 0 : index
    %c72 = arith.constant 72 : index
    %43 = vector.load %arg5[%c0_68, %c72] : memref<8x326xf32, #tpu.memory_space<vmem>>, vector<4x1xf32>
    tpu.vector_store %arg5[%c0_68, %c72], %42 {strides = array<i32>} : memref<8x326xf32, #tpu.memory_space<vmem>>, vector<4x1xf32>,
    %c0_69 = arith.constant 0 : index
    %c0_70 = arith.constant 0 : index
    %c3_71 = arith.constant 3 : index
    %c14_72 = arith.constant 14 : index
    %44 = vector.load %arg1[%c0_69, %c0_70, %c3_71, %c14_72] : memref<1x4x16x16xf32, #tpu.memory_space<vmem>>, vector<1x4x1x1xf32>
    %45 = vector.shape_cast %44 : vector<1x4x1x1xf32> to vector<4x1xf32>
    %c0_73 = arith.constant 0 : index
    %c89 = arith.constant 89 : index
    %46 = vector.load %arg5[%c0_73, %c89] : memref<8x326xf32, #tpu.memory_space<vmem>>, vector<4x1xf32>
    tpu.vector_store %arg5[%c0_73, %c89], %45 {strides = array<i32>} : memref<8x326xf32, #tpu.memory_space<vmem>>, vector<4x1xf32>,
    %c0_74 = arith.constant 0 : index
    %c0_75 = arith.constant 0 : index
    %c4 = arith.constant 4 : index
    %c0_76 = arith.constant 0 : index
    %47 = vector.load %arg1[%c0_74, %c0_75, %c4, %c0_76] : memref<1x4x16x16xf32, #tpu.memory_space<vmem>>, vector<1x4x1x16xf32>
    %48 = vector.shape_cast %47 : vector<1x4x1x16xf32> to vector<4x16xf32>
    %c0_77 = arith.constant 0 : index
    %c91 = arith.constant 91 : index
    %49 = vector.load %arg5[%c0_77, %c91] : memref<8x326xf32, #tpu.memory_space<vmem>>, vector<4x16xf32>
    tpu.vector_store %arg5[%c0_77, %c91], %48 {strides = array<i32>} : memref<8x326xf32, #tpu.memory_space<vmem>>, vector<4x16xf32>,
    %c0_78 = arith.constant 0 : index
    %c0_79 = arith.constant 0 : index
    %c4_80 = arith.constant 4 : index
    %c1_81 = arith.constant 1 : index
    %50 = vector.load %arg1[%c0_78, %c0_79, %c4_80, %c1_81] : memref<1x4x16x16xf32, #tpu.memory_space<vmem>>, vector<1x4x1x1xf32>
    %51 = vector.shape_cast %50 : vector<1x4x1x1xf32> to vector<4x1xf32>
    %c0_82 = arith.constant 0 : index
    %c90 = arith.constant 90 : index
    %52 = vector.load %arg5[%c0_82, %c90] : memref<8x326xf32, #tpu.memory_space<vmem>>, vector<4x1xf32>
    tpu.vector_store %arg5[%c0_82, %c90], %51 {strides = array<i32>} : memref<8x326xf32, #tpu.memory_space<vmem>>, vector<4x1xf32>,
    %c0_83 = arith.constant 0 : index
    %c0_84 = arith.constant 0 : index
    %c4_85 = arith.constant 4 : index
    %c14_86 = arith.constant 14 : index
    %53 = vector.load %arg1[%c0_83, %c0_84, %c4_85, %c14_86] : memref<1x4x16x16xf32, #tpu.memory_space<vmem>>, vector<1x4x1x1xf32>
    %54 = vector.shape_cast %53 : vector<1x4x1x1xf32> to vector<4x1xf32>
    %c0_87 = arith.constant 0 : index
    %c107 = arith.constant 107 : index
    %55 = vector.load %arg5[%c0_87, %c107] : memref<8x326xf32, #tpu.memory_space<vmem>>, vector<4x1xf32>
    tpu.vector_store %arg5[%c0_87, %c107], %54 {strides = array<i32>} : memref<8x326xf32, #tpu.memory_space<vmem>>, vector<4x1xf32>,
    %c0_88 = arith.constant 0 : index
    %c0_89 = arith.constant 0 : index
    %c5 = arith.constant 5 : index
    %c0_90 = arith.constant 0 : index
    %56 = vector.load %arg1[%c0_88, %c0_89, %c5, %c0_90] : memref<1x4x16x16xf32, #tpu.memory_space<vmem>>, vector<1x4x1x16xf32>
    %57 = vector.shape_cast %56 : vector<1x4x1x16xf32> to vector<4x16xf32>
    %c0_91 = arith.constant 0 : index
    %c109 = arith.constant 109 : index
    %58 = vector.load %arg5[%c0_91, %c109] : memref<8x326xf32, #tpu.memory_space<vmem>>, vector<4x16xf32>
    tpu.vector_store %arg5[%c0_91, %c109], %57 {strides = array<i32>} : memref<8x326xf32, #tpu.memory_space<vmem>>, vector<4x16xf32>,
    %c0_92 = arith.constant 0 : index
    %c0_93 = arith.constant 0 : index
    %c5_94 = arith.constant 5 : index
    %c1_95 = arith.constant 1 : index
    %59 = vector.load %arg1[%c0_92, %c0_93, %c5_94, %c1_95] : memref<1x4x16x16xf32, #tpu.memory_space<vmem>>, vector<1x4x1x1xf32>
    %60 = vector.shape_cast %59 : vector<1x4x1x1xf32> to vector<4x1xf32>
    %c0_96 = arith.constant 0 : index
    %c108 = arith.constant 108 : index
    %61 = vector.load %arg5[%c0_96, %c108] : memref<8x326xf32, #tpu.memory_space<vmem>>, vector<4x1xf32>
    tpu.vector_store %arg5[%c0_96, %c108], %60 {strides = array<i32>} : memref<8x326xf32, #tpu.memory_space<vmem>>, vector<4x1xf32>,
    %c0_97 = arith.constant 0 : index
    %c0_98 = arith.constant 0 : index
    %c5_99 = arith.constant 5 : index
    %c14_100 = arith.constant 14 : index
    %62 = vector.load %arg1[%c0_97, %c0_98, %c5_99, %c14_100] : memref<1x4x16x16xf32, #tpu.memory_space<vmem>>, vector<1x4x1x1xf32>
    %63 = vector.shape_cast %62 : vector<1x4x1x1xf32> to vector<4x1xf32>
    %c0_101 = arith.constant 0 : index
    %c125 = arith.constant 125 : index
    %64 = vector.load %arg5[%c0_101, %c125] : memref<8x326xf32, #tpu.memory_space<vmem>>, vector<4x1xf32>
    tpu.vector_store %arg5[%c0_101, %c125], %63 {strides = array<i32>} : memref<8x326xf32, #tpu.memory_space<vmem>>, vector<4x1xf32>,
    %c0_102 = arith.constant 0 : index
    %c0_103 = arith.constant 0 : index
    %c6 = arith.constant 6 : index
    %c0_104 = arith.constant 0 : index
    %65 = vector.load %arg1[%c0_102, %c0_103, %c6, %c0_104] : memref<1x4x16x16xf32, #tpu.memory_space<vmem>>, vector<1x4x1x16xf32>
    %66 = vector.shape_cast %65 : vector<1x4x1x16xf32> to vector<4x16xf32>
    %c0_105 = arith.constant 0 : index
    %c127 = arith.constant 127 : index
    %67 = vector.load %arg5[%c0_105, %c127] : memref<8x326xf32, #tpu.memory_space<vmem>>, vector<4x16xf32>
    tpu.vector_store %arg5[%c0_105, %c127], %66 {strides = array<i32>} : memref<8x326xf32, #tpu.memory_space<vmem>>, vector<4x16xf32>,
    %c0_106 = arith.constant 0 : index
    %c0_107 = arith.constant 0 : index
    %c6_108 = arith.constant 6 : index
    %c1_109 = arith.constant 1 : index
    %68 = vector.load %arg1[%c0_106, %c0_107, %c6_108, %c1_109] : memref<1x4x16x16xf32, #tpu.memory_space<vmem>>, vector<1x4x1x1xf32>
    %69 = vector.shape_cast %68 : vector<1x4x1x1xf32> to vector<4x1xf32>
    %c0_110 = arith.constant 0 : index
    %c126 = arith.constant 126 : index
    %70 = vector.load %arg5[%c0_110, %c126] : memref<8x326xf32, #tpu.memory_space<vmem>>, vector<4x1xf32>
    tpu.vector_store %arg5[%c0_110, %c126], %69 {strides = array<i32>} : memref<8x326xf32, #tpu.memory_space<vmem>>, vector<4x1xf32>,
    %c0_111 = arith.constant 0 : index
    %c0_112 = arith.constant 0 : index
    %c6_113 = arith.constant 6 : index
    %c14_114 = arith.constant 14 : index
    %71 = vector.load %arg1[%c0_111, %c0_112, %c6_113, %c14_114] : memref<1x4x16x16xf32, #tpu.memory_space<vmem>>, vector<1x4x1x1xf32>
    %72 = vector.shape_cast %71 : vector<1x4x1x1xf32> to vector<4x1xf32>
    %c0_115 = arith.constant 0 : index
    %c143 = arith.constant 143 : index
    %73 = vector.load %arg5[%c0_115, %c143] : memref<8x326xf32, #tpu.memory_space<vmem>>, vector<4x1xf32>
    tpu.vector_store %arg5[%c0_115, %c143], %72 {strides = array<i32>} : memref<8x326xf32, #tpu.memory_space<vmem>>, vector<4x1xf32>,
    %c0_116 = arith.constant 0 : index
    %c0_117 = arith.constant 0 : index
    %c7 = arith.constant 7 : index
    %c0_118 = arith.constant 0 : index
    %74 = vector.load %arg1[%c0_116, %c0_117, %c7, %c0_118] : memref<1x4x16x16xf32, #tpu.memory_space<vmem>>, vector<1x4x1x16xf32>
    %75 = vector.shape_cast %74 : vector<1x4x1x16xf32> to vector<4x16xf32>
    %c0_119 = arith.constant 0 : index
    %c145 = arith.constant 145 : index
    %76 = vector.load %arg5[%c0_119, %c145] : memref<8x326xf32, #tpu.memory_space<vmem>>, vector<4x16xf32>
    tpu.vector_store %arg5[%c0_119, %c145], %75 {strides = array<i32>} : memref<8x326xf32, #tpu.memory_space<vmem>>, vector<4x16xf32>,
    %c0_120 = arith.constant 0 : index
    %c0_121 = arith.constant 0 : index
    %c7_122 = arith.constant 7 : index
    %c1_123 = arith.constant 1 : index
    %77 = vector.load %arg1[%c0_120, %c0_121, %c7_122, %c1_123] : memref<1x4x16x16xf32, #tpu.memory_space<vmem>>, vector<1x4x1x1xf32>
    %78 = vector.shape_cast %77 : vector<1x4x1x1xf32> to vector<4x1xf32>
    %c0_124 = arith.constant 0 : index
    %c144 = arith.constant 144 : index
    %79 = vector.load %arg5[%c0_124, %c144] : memref<8x326xf32, #tpu.memory_space<vmem>>, vector<4x1xf32>
    tpu.vector_store %arg5[%c0_124, %c144], %78 {strides = array<i32>} : memref<8x326xf32, #tpu.memory_space<vmem>>, vector<4x1xf32>,
    %c0_125 = arith.constant 0 : index
    %c0_126 = arith.constant 0 : index
    %c7_127 = arith.constant 7 : index
    %c14_128 = arith.constant 14 : index
    %80 = vector.load %arg1[%c0_125, %c0_126, %c7_127, %c14_128] : memref<1x4x16x16xf32, #tpu.memory_space<vmem>>, vector<1x4x1x1xf32>
    %81 = vector.shape_cast %80 : vector<1x4x1x1xf32> to vector<4x1xf32>
    %c0_129 = arith.constant 0 : index
    %c161 = arith.constant 161 : index
    %82 = vector.load %arg5[%c0_129, %c161] : memref<8x326xf32, #tpu.memory_space<vmem>>, vector<4x1xf32>
    tpu.vector_store %arg5[%c0_129, %c161], %81 {strides = array<i32>} : memref<8x326xf32, #tpu.memory_space<vmem>>, vector<4x1xf32>,
    %c0_130 = arith.constant 0 : index
    %c0_131 = arith.constant 0 : index
    %c8 = arith.constant 8 : index
    %c0_132 = arith.constant 0 : index
    %83 = vector.load %arg1[%c0_130, %c0_131, %c8, %c0_132] : memref<1x4x16x16xf32, #tpu.memory_space<vmem>>, vector<1x4x1x16xf32>
    %84 = vector.shape_cast %83 : vector<1x4x1x16xf32> to vector<4x16xf32>
    %c0_133 = arith.constant 0 : index
    %c163 = arith.constant 163 : index
    %85 = vector.load %arg5[%c0_133, %c163] : memref<8x326xf32, #tpu.memory_space<vmem>>, vector<4x16xf32>
    tpu.vector_store %arg5[%c0_133, %c163], %84 {strides = array<i32>} : memref<8x326xf32, #tpu.memory_space<vmem>>, vector<4x16xf32>,
    %c0_134 = arith.constant 0 : index
    %c0_135 = arith.constant 0 : index
    %c8_136 = arith.constant 8 : index
    %c1_137 = arith.constant 1 : index
    %86 = vector.load %arg1[%c0_134, %c0_135, %c8_136, %c1_137] : memref<1x4x16x16xf32, #tpu.memory_space<vmem>>, vector<1x4x1x1xf32>
    %87 = vector.shape_cast %86 : vector<1x4x1x1xf32> to vector<4x1xf32>
    %c0_138 = arith.constant 0 : index
    %c162 = arith.constant 162 : index
    %88 = vector.load %arg5[%c0_138, %c162] : memref<8x326xf32, #tpu.memory_space<vmem>>, vector<4x1xf32>
    tpu.vector_store %arg5[%c0_138, %c162], %87 {strides = array<i32>} : memref<8x326xf32, #tpu.memory_space<vmem>>, vector<4x1xf32>,
    %c0_139 = arith.constant 0 : index
    %c0_140 = arith.constant 0 : index
    %c8_141 = arith.constant 8 : index
    %c14_142 = arith.constant 14 : index
    %89 = vector.load %arg1[%c0_139, %c0_140, %c8_141, %c14_142] : memref<1x4x16x16xf32, #tpu.memory_space<vmem>>, vector<1x4x1x1xf32>
    %90 = vector.shape_cast %89 : vector<1x4x1x1xf32> to vector<4x1xf32>
    %c0_143 = arith.constant 0 : index
    %c179 = arith.constant 179 : index
    %91 = vector.load %arg5[%c0_143, %c179] : memref<8x326xf32, #tpu.memory_space<vmem>>, vector<4x1xf32>
    tpu.vector_store %arg5[%c0_143, %c179], %90 {strides = array<i32>} : memref<8x326xf32, #tpu.memory_space<vmem>>, vector<4x1xf32>,
    %c0_144 = arith.constant 0 : index
    %c0_145 = arith.constant 0 : index
    %c9 = arith.constant 9 : index
    %c0_146 = arith.constant 0 : index
    %92 = vector.load %arg1[%c0_144, %c0_145, %c9, %c0_146] : memref<1x4x16x16xf32, #tpu.memory_space<vmem>>, vector<1x4x1x16xf32>
    %93 = vector.shape_cast %92 : vector<1x4x1x16xf32> to vector<4x16xf32>
    %c0_147 = arith.constant 0 : index
    %c181 = arith.constant 181 : index
    %94 = vector.load %arg5[%c0_147, %c181] : memref<8x326xf32, #tpu.memory_space<vmem>>, vector<4x16xf32>
    tpu.vector_store %arg5[%c0_147, %c181], %93 {strides = array<i32>} : memref<8x326xf32, #tpu.memory_space<vmem>>, vector<4x16xf32>,
    %c0_148 = arith.constant 0 : index
    %c0_149 = arith.constant 0 : index
    %c9_150 = arith.constant 9 : index
    %c1_151 = arith.constant 1 : index
    %95 = vector.load %arg1[%c0_148, %c0_149, %c9_150, %c1_151] : memref<1x4x16x16xf32, #tpu.memory_space<vmem>>, vector<1x4x1x1xf32>
    %96 = vector.shape_cast %95 : vector<1x4x1x1xf32> to vector<4x1xf32>
    %c0_152 = arith.constant 0 : index
    %c180 = arith.constant 180 : index
    %97 = vector.load %arg5[%c0_152, %c180] : memref<8x326xf32, #tpu.memory_space<vmem>>, vector<4x1xf32>
    tpu.vector_store %arg5[%c0_152, %c180], %96 {strides = array<i32>} : memref<8x326xf32, #tpu.memory_space<vmem>>, vector<4x1xf32>,
    %c0_153 = arith.constant 0 : index
    %c0_154 = arith.constant 0 : index
    %c9_155 = arith.constant 9 : index
    %c14_156 = arith.constant 14 : index
    %98 = vector.load %arg1[%c0_153, %c0_154, %c9_155, %c14_156] : memref<1x4x16x16xf32, #tpu.memory_space<vmem>>, vector<1x4x1x1xf32>
    %99 = vector.shape_cast %98 : vector<1x4x1x1xf32> to vector<4x1xf32>
    %c0_157 = arith.constant 0 : index
    %c197 = arith.constant 197 : index
    %100 = vector.load %arg5[%c0_157, %c197] : memref<8x326xf32, #tpu.memory_space<vmem>>, vector<4x1xf32>
    tpu.vector_store %arg5[%c0_157, %c197], %99 {strides = array<i32>} : memref<8x326xf32, #tpu.memory_space<vmem>>, vector<4x1xf32>,
    %c0_158 = arith.constant 0 : index
    %c0_159 = arith.constant 0 : index
    %c10 = arith.constant 10 : index
    %c0_160 = arith.constant 0 : index
    %101 = vector.load %arg1[%c0_158, %c0_159, %c10, %c0_160] : memref<1x4x16x16xf32, #tpu.memory_space<vmem>>, vector<1x4x1x16xf32>
    %102 = vector.shape_cast %101 : vector<1x4x1x16xf32> to vector<4x16xf32>
    %c0_161 = arith.constant 0 : index
    %c199 = arith.constant 199 : index
    %103 = vector.load %arg5[%c0_161, %c199] : memref<8x326xf32, #tpu.memory_space<vmem>>, vector<4x16xf32>
    tpu.vector_store %arg5[%c0_161, %c199], %102 {strides = array<i32>} : memref<8x326xf32, #tpu.memory_space<vmem>>, vector<4x16xf32>,
    %c0_162 = arith.constant 0 : index
    %c0_163 = arith.constant 0 : index
    %c10_164 = arith.constant 10 : index
    %c1_165 = arith.constant 1 : index
    %104 = vector.load %arg1[%c0_162, %c0_163, %c10_164, %c1_165] : memref<1x4x16x16xf32, #tpu.memory_space<vmem>>, vector<1x4x1x1xf32>
    %105 = vector.shape_cast %104 : vector<1x4x1x1xf32> to vector<4x1xf32>
    %c0_166 = arith.constant 0 : index
    %c198 = arith.constant 198 : index
    %106 = vector.load %arg5[%c0_166, %c198] : memref<8x326xf32, #tpu.memory_space<vmem>>, vector<4x1xf32>
    tpu.vector_store %arg5[%c0_166, %c198], %105 {strides = array<i32>} : memref<8x326xf32, #tpu.memory_space<vmem>>, vector<4x1xf32>,
    %c0_167 = arith.constant 0 : index
    %c0_168 = arith.constant 0 : index
    %c10_169 = arith.constant 10 : index
    %c14_170 = arith.constant 14 : index
    %107 = vector.load %arg1[%c0_167, %c0_168, %c10_169, %c14_170] : memref<1x4x16x16xf32, #tpu.memory_space<vmem>>, vector<1x4x1x1xf32>
    %108 = vector.shape_cast %107 : vector<1x4x1x1xf32> to vector<4x1xf32>
    %c0_171 = arith.constant 0 : index
    %c215 = arith.constant 215 : index
    %109 = vector.load %arg5[%c0_171, %c215] : memref<8x326xf32, #tpu.memory_space<vmem>>, vector<4x1xf32>
    tpu.vector_store %arg5[%c0_171, %c215], %108 {strides = array<i32>} : memref<8x326xf32, #tpu.memory_space<vmem>>, vector<4x1xf32>,
    %c0_172 = arith.constant 0 : index
    %c0_173 = arith.constant 0 : index
    %c11 = arith.constant 11 : index
    %c0_174 = arith.constant 0 : index
    %110 = vector.load %arg1[%c0_172, %c0_173, %c11, %c0_174] : memref<1x4x16x16xf32, #tpu.memory_space<vmem>>, vector<1x4x1x16xf32>
    %111 = vector.shape_cast %110 : vector<1x4x1x16xf32> to vector<4x16xf32>
    %c0_175 = arith.constant 0 : index
    %c217 = arith.constant 217 : index
    %112 = vector.load %arg5[%c0_175, %c217] : memref<8x326xf32, #tpu.memory_space<vmem>>, vector<4x16xf32>
    tpu.vector_store %arg5[%c0_175, %c217], %111 {strides = array<i32>} : memref<8x326xf32, #tpu.memory_space<vmem>>, vector<4x16xf32>,
    %c0_176 = arith.constant 0 : index
    %c0_177 = arith.constant 0 : index
    %c11_178 = arith.constant 11 : index
    %c1_179 = arith.constant 1 : index
    %113 = vector.load %arg1[%c0_176, %c0_177, %c11_178, %c1_179] : memref<1x4x16x16xf32, #tpu.memory_space<vmem>>, vector<1x4x1x1xf32>
    %114 = vector.shape_cast %113 : vector<1x4x1x1xf32> to vector<4x1xf32>
    %c0_180 = arith.constant 0 : index
    %c216 = arith.constant 216 : index
    %115 = vector.load %arg5[%c0_180, %c216] : memref<8x326xf32, #tpu.memory_space<vmem>>, vector<4x1xf32>
    tpu.vector_store %arg5[%c0_180, %c216], %114 {strides = array<i32>} : memref<8x326xf32, #tpu.memory_space<vmem>>, vector<4x1xf32>,
    %c0_181 = arith.constant 0 : index
    %c0_182 = arith.constant 0 : index
    %c11_183 = arith.constant 11 : index
    %c14_184 = arith.constant 14 : index
    %116 = vector.load %arg1[%c0_181, %c0_182, %c11_183, %c14_184] : memref<1x4x16x16xf32, #tpu.memory_space<vmem>>, vector<1x4x1x1xf32>
    %117 = vector.shape_cast %116 : vector<1x4x1x1xf32> to vector<4x1xf32>
    %c0_185 = arith.constant 0 : index
    %c233 = arith.constant 233 : index
    %118 = vector.load %arg5[%c0_185, %c233] : memref<8x326xf32, #tpu.memory_space<vmem>>, vector<4x1xf32>
    tpu.vector_store %arg5[%c0_185, %c233], %117 {strides = array<i32>} : memref<8x326xf32, #tpu.memory_space<vmem>>, vector<4x1xf32>,
    %c0_186 = arith.constant 0 : index
    %c0_187 = arith.constant 0 : index
    %c12 = arith.constant 12 : index
    %c0_188 = arith.constant 0 : index
    %119 = vector.load %arg1[%c0_186, %c0_187, %c12, %c0_188] : memref<1x4x16x16xf32, #tpu.memory_space<vmem>>, vector<1x4x1x16xf32>
    %120 = vector.shape_cast %119 : vector<1x4x1x16xf32> to vector<4x16xf32>
    %c0_189 = arith.constant 0 : index
    %c235 = arith.constant 235 : index
    %121 = vector.load %arg5[%c0_189, %c235] : memref<8x326xf32, #tpu.memory_space<vmem>>, vector<4x16xf32>
    tpu.vector_store %arg5[%c0_189, %c235], %120 {strides = array<i32>} : memref<8x326xf32, #tpu.memory_space<vmem>>, vector<4x16xf32>,
    %c0_190 = arith.constant 0 : index
    %c0_191 = arith.constant 0 : index
    %c12_192 = arith.constant 12 : index
    %c1_193 = arith.constant 1 : index
    %122 = vector.load %arg1[%c0_190, %c0_191, %c12_192, %c1_193] : memref<1x4x16x16xf32, #tpu.memory_space<vmem>>, vector<1x4x1x1xf32>
    %123 = vector.shape_cast %122 : vector<1x4x1x1xf32> to vector<4x1xf32>
    %c0_194 = arith.constant 0 : index
    %c234 = arith.constant 234 : index
    %124 = vector.load %arg5[%c0_194, %c234] : memref<8x326xf32, #tpu.memory_space<vmem>>, vector<4x1xf32>
    tpu.vector_store %arg5[%c0_194, %c234], %123 {strides = array<i32>} : memref<8x326xf32, #tpu.memory_space<vmem>>, vector<4x1xf32>,
    %c0_195 = arith.constant 0 : index
    %c0_196 = arith.constant 0 : index
    %c12_197 = arith.constant 12 : index
    %c14_198 = arith.constant 14 : index
    %125 = vector.load %arg1[%c0_195, %c0_196, %c12_197, %c14_198] : memref<1x4x16x16xf32, #tpu.memory_space<vmem>>, vector<1x4x1x1xf32>
    %126 = vector.shape_cast %125 : vector<1x4x1x1xf32> to vector<4x1xf32>
    %c0_199 = arith.constant 0 : index
    %c251 = arith.constant 251 : index
    %127 = vector.load %arg5[%c0_199, %c251] : memref<8x326xf32, #tpu.memory_space<vmem>>, vector<4x1xf32>
    tpu.vector_store %arg5[%c0_199, %c251], %126 {strides = array<i32>} : memref<8x326xf32, #tpu.memory_space<vmem>>, vector<4x1xf32>,
    %c0_200 = arith.constant 0 : index
    %c0_201 = arith.constant 0 : index
    %c13 = arith.constant 13 : index
    %c0_202 = arith.constant 0 : index
    %128 = vector.load %arg1[%c0_200, %c0_201, %c13, %c0_202] : memref<1x4x16x16xf32, #tpu.memory_space<vmem>>, vector<1x4x1x16xf32>
    %129 = vector.shape_cast %128 : vector<1x4x1x16xf32> to vector<4x16xf32>
    %c0_203 = arith.constant 0 : index
    %c253 = arith.constant 253 : index
    %130 = vector.load %arg5[%c0_203, %c253] : memref<8x326xf32, #tpu.memory_space<vmem>>, vector<4x16xf32>
    tpu.vector_store %arg5[%c0_203, %c253], %129 {strides = array<i32>} : memref<8x326xf32, #tpu.memory_space<vmem>>, vector<4x16xf32>,
    %c0_204 = arith.constant 0 : index
    %c0_205 = arith.constant 0 : index
    %c13_206 = arith.constant 13 : index
    %c1_207 = arith.constant 1 : index
    %131 = vector.load %arg1[%c0_204, %c0_205, %c13_206, %c1_207] : memref<1x4x16x16xf32, #tpu.memory_space<vmem>>, vector<1x4x1x1xf32>
    %132 = vector.shape_cast %131 : vector<1x4x1x1xf32> to vector<4x1xf32>
    %c0_208 = arith.constant 0 : index
    %c252 = arith.constant 252 : index
    %133 = vector.load %arg5[%c0_208, %c252] : memref<8x326xf32, #tpu.memory_space<vmem>>, vector<4x1xf32>
    tpu.vector_store %arg5[%c0_208, %c252], %132 {strides = array<i32>} : memref<8x326xf32, #tpu.memory_space<vmem>>, vector<4x1xf32>,
    %c0_209 = arith.constant 0 : index
    %c0_210 = arith.constant 0 : index
    %c13_211 = arith.constant 13 : index
    %c14_212 = arith.constant 14 : index
    %134 = vector.load %arg1[%c0_209, %c0_210, %c13_211, %c14_212] : memref<1x4x16x16xf32, #tpu.memory_space<vmem>>, vector<1x4x1x1xf32>
    %135 = vector.shape_cast %134 : vector<1x4x1x1xf32> to vector<4x1xf32>
    %c0_213 = arith.constant 0 : index
    %c269 = arith.constant 269 : index
    %136 = vector.load %arg5[%c0_213, %c269] : memref<8x326xf32, #tpu.memory_space<vmem>>, vector<4x1xf32>
    tpu.vector_store %arg5[%c0_213, %c269], %135 {strides = array<i32>} : memref<8x326xf32, #tpu.memory_space<vmem>>, vector<4x1xf32>,
    %c0_214 = arith.constant 0 : index
    %c0_215 = arith.constant 0 : index
    %c14_216 = arith.constant 14 : index
    %c0_217 = arith.constant 0 : index
    %137 = vector.load %arg1[%c0_214, %c0_215, %c14_216, %c0_217] : memref<1x4x16x16xf32, #tpu.memory_space<vmem>>, vector<1x4x1x16xf32>
    %138 = vector.shape_cast %137 : vector<1x4x1x16xf32> to vector<4x16xf32>
    %c0_218 = arith.constant 0 : index
    %c271 = arith.constant 271 : index
    %139 = vector.load %arg5[%c0_218, %c271] : memref<8x326xf32, #tpu.memory_space<vmem>>, vector<4x16xf32>
    tpu.vector_store %arg5[%c0_218, %c271], %138 {strides = array<i32>} : memref<8x326xf32, #tpu.memory_space<vmem>>, vector<4x16xf32>,
    %c0_219 = arith.constant 0 : index
    %c0_220 = arith.constant 0 : index
    %c14_221 = arith.constant 14 : index
    %c1_222 = arith.constant 1 : index
    %140 = vector.load %arg1[%c0_219, %c0_220, %c14_221, %c1_222] : memref<1x4x16x16xf32, #tpu.memory_space<vmem>>, vector<1x4x1x1xf32>
    %141 = vector.shape_cast %140 : vector<1x4x1x1xf32> to vector<4x1xf32>
    %c0_223 = arith.constant 0 : index
    %c270 = arith.constant 270 : index
    %142 = vector.load %arg5[%c0_223, %c270] : memref<8x326xf32, #tpu.memory_space<vmem>>, vector<4x1xf32>
    tpu.vector_store %arg5[%c0_223, %c270], %141 {strides = array<i32>} : memref<8x326xf32, #tpu.memory_space<vmem>>, vector<4x1xf32>,
    %c0_224 = arith.constant 0 : index
    %c0_225 = arith.constant 0 : index
    %c14_226 = arith.constant 14 : index
    %c14_227 = arith.constant 14 : index
    %143 = vector.load %arg1[%c0_224, %c0_225, %c14_226, %c14_227] : memref<1x4x16x16xf32, #tpu.memory_space<vmem>>, vector<1x4x1x1xf32>
    %144 = vector.shape_cast %143 : vector<1x4x1x1xf32> to vector<4x1xf32>
    %c0_228 = arith.constant 0 : index
    %c287 = arith.constant 287 : index
    %145 = vector.load %arg5[%c0_228, %c287] : memref<8x326xf32, #tpu.memory_space<vmem>>, vector<4x1xf32>
    tpu.vector_store %arg5[%c0_228, %c287], %144 {strides = array<i32>} : memref<8x326xf32, #tpu.memory_space<vmem>>, vector<4x1xf32>,
    %c0_229 = arith.constant 0 : index
    %c0_230 = arith.constant 0 : index
    %c15 = arith.constant 15 : index
    %c0_231 = arith.constant 0 : index
    %146 = vector.load %arg1[%c0_229, %c0_230, %c15, %c0_231] : memref<1x4x16x16xf32, #tpu.memory_space<vmem>>, vector<1x4x1x16xf32>
    %147 = vector.shape_cast %146 : vector<1x4x1x16xf32> to vector<4x16xf32>
    %c0_232 = arith.constant 0 : index
    %c289 = arith.constant 289 : index
    %148 = vector.load %arg5[%c0_232, %c289] : memref<8x326xf32, #tpu.memory_space<vmem>>, vector<4x16xf32>
    tpu.vector_store %arg5[%c0_232, %c289], %147 {strides = array<i32>} : memref<8x326xf32, #tpu.memory_space<vmem>>, vector<4x16xf32>,
    %c0_233 = arith.constant 0 : index
    %c0_234 = arith.constant 0 : index
    %c15_235 = arith.constant 15 : index
    %c1_236 = arith.constant 1 : index
    %149 = vector.load %arg1[%c0_233, %c0_234, %c15_235, %c1_236] : memref<1x4x16x16xf32, #tpu.memory_space<vmem>>, vector<1x4x1x1xf32>
    %150 = vector.shape_cast %149 : vector<1x4x1x1xf32> to vector<4x1xf32>
    %c0_237 = arith.constant 0 : index
    %c288 = arith.constant 288 : index
    %151 = vector.load %arg5[%c0_237, %c288] : memref<8x326xf32, #tpu.memory_space<vmem>>, vector<4x1xf32>
    tpu.vector_store %arg5[%c0_237, %c288], %150 {strides = array<i32>} : memref<8x326xf32, #tpu.memory_space<vmem>>, vector<4x1xf32>,
    %c0_238 = arith.constant 0 : index
    %c0_239 = arith.constant 0 : index
    %c15_240 = arith.constant 15 : index
    %c14_241 = arith.constant 14 : index
    %152 = vector.load %arg1[%c0_238, %c0_239, %c15_240, %c14_241] : memref<1x4x16x16xf32, #tpu.memory_space<vmem>>, vector<1x4x1x1xf32>
    %153 = vector.shape_cast %152 : vector<1x4x1x1xf32> to vector<4x1xf32>
    %c0_242 = arith.constant 0 : index
    %c305 = arith.constant 305 : index
    %154 = vector.load %arg5[%c0_242, %c305] : memref<8x326xf32, #tpu.memory_space<vmem>>, vector<4x1xf32>
    tpu.vector_store %arg5[%c0_242, %c305], %153 {strides = array<i32>} : memref<8x326xf32, #tpu.memory_space<vmem>>, vector<4x1xf32>,
    %c0_243 = arith.constant 0 : index
    %c0_244 = arith.constant 0 : index
    %c14_245 = arith.constant 14 : index
    %c0_246 = arith.constant 0 : index
    %155 = vector.load %arg1[%c0_243, %c0_244, %c14_245, %c0_246] : memref<1x4x16x16xf32, #tpu.memory_space<vmem>>, vector<1x4x1x16xf32>
    %156 = vector.shape_cast %155 : vector<1x4x1x16xf32> to vector<4x16xf32>
    %c0_247 = arith.constant 0 : index
    %c307 = arith.constant 307 : index
    %157 = vector.load %arg5[%c0_247, %c307] : memref<8x326xf32, #tpu.memory_space<vmem>>, vector<4x16xf32>
    tpu.vector_store %arg5[%c0_247, %c307], %156 {strides = array<i32>} : memref<8x326xf32, #tpu.memory_space<vmem>>, vector<4x16xf32>,
    %c0_248 = arith.constant 0 : index
    %c0_249 = arith.constant 0 : index
    %c14_250 = arith.constant 14 : index
    %c1_251 = arith.constant 1 : index
    %158 = vector.load %arg1[%c0_248, %c0_249, %c14_250, %c1_251] : memref<1x4x16x16xf32, #tpu.memory_space<vmem>>, vector<1x4x1x1xf32>
    %159 = vector.shape_cast %158 : vector<1x4x1x1xf32> to vector<4x1xf32>
    %c0_252 = arith.constant 0 : index
    %c306 = arith.constant 306 : index
    %160 = vector.load %arg5[%c0_252, %c306] : memref<8x326xf32, #tpu.memory_space<vmem>>, vector<4x1xf32>
    tpu.vector_store %arg5[%c0_252, %c306], %159 {strides = array<i32>} : memref<8x326xf32, #tpu.memory_space<vmem>>, vector<4x1xf32>,
    %c0_253 = arith.constant 0 : index
    %c0_254 = arith.constant 0 : index
    %c14_255 = arith.constant 14 : index
    %c14_256 = arith.constant 14 : index
    %161 = vector.load %arg1[%c0_253, %c0_254, %c14_255, %c14_256] : memref<1x4x16x16xf32, #tpu.memory_space<vmem>>, vector<1x4x1x1xf32>
    %162 = vector.shape_cast %161 : vector<1x4x1x1xf32> to vector<4x1xf32>
    %c0_257 = arith.constant 0 : index
    %c323 = arith.constant 323 : index
    %163 = vector.load %arg5[%c0_257, %c323] : memref<8x326xf32, #tpu.memory_space<vmem>>, vector<4x1xf32>
    tpu.vector_store %arg5[%c0_257, %c323], %162 {strides = array<i32>} : memref<8x326xf32, #tpu.memory_space<vmem>>, vector<4x1xf32>,
    %c0_258 = arith.constant 0 : index
    %c0_259 = arith.constant 0 : index
    %164 = vector.load %arg5[%c0_258, %c0_259] : memref<8x326xf32, #tpu.memory_space<vmem>>, vector<8x288xf32>
    %c0_260 = arith.constant 0 : index
    %c0_261 = arith.constant 0 : index
    %165 = vector.load %arg6[%c0_260, %c0_261] : memref<72x288xf32, #tpu.memory_space<vmem>>, vector<8x288xf32>
    tpu.vector_store %arg6[%c0_260, %c0_261], %164 {strides = array<i32>} : memref<72x288xf32, #tpu.memory_space<vmem>>, vector<8x288xf32>,
    %c0_262 = arith.constant 0 : index
    %c1_263 = arith.constant 1 : index
    %166 = vector.load %arg5[%c0_262, %c1_263] : memref<8x326xf32, #tpu.memory_space<vmem>>, vector<8x288xf32>
    %c8_264 = arith.constant 8 : index
    %c0_265 = arith.constant 0 : index
    %167 = vector.load %arg6[%c8_264, %c0_265] : memref<72x288xf32, #tpu.memory_space<vmem>>, vector<8x288xf32>
    tpu.vector_store %arg6[%c8_264, %c0_265], %166 {strides = array<i32>} : memref<72x288xf32, #tpu.memory_space<vmem>>, vector<8x288xf32>,
    %c0_266 = arith.constant 0 : index
    %c2_267 = arith.constant 2 : index
    %168 = vector.load %arg5[%c0_266, %c2_267] : memref<8x326xf32, #tpu.memory_space<vmem>>, vector<8x288xf32>
    %c16 = arith.constant 16 : index
    %c0_268 = arith.constant 0 : index
    %169 = vector.load %arg6[%c16, %c0_268] : memref<72x288xf32, #tpu.memory_space<vmem>>, vector<8x288xf32>
    tpu.vector_store %arg6[%c16, %c0_268], %168 {strides = array<i32>} : memref<72x288xf32, #tpu.memory_space<vmem>>, vector<8x288xf32>,
    %c0_269 = arith.constant 0 : index
    %c18_270 = arith.constant 18 : index
    %170 = vector.load %arg5[%c0_269, %c18_270] : memref<8x326xf32, #tpu.memory_space<vmem>>, vector<8x288xf32>
    %c24 = arith.constant 24 : index
    %c0_271 = arith.constant 0 : index
    %171 = vector.load %arg6[%c24, %c0_271] : memref<72x288xf32, #tpu.memory_space<vmem>>, vector<8x288xf32>
    tpu.vector_store %arg6[%c24, %c0_271], %170 {strides = array<i32>} : memref<72x288xf32, #tpu.memory_space<vmem>>, vector<8x288xf32>,
    %c0_272 = arith.constant 0 : index
    %c19_273 = arith.constant 19 : index
    %172 = vector.load %arg5[%c0_272, %c19_273] : memref<8x326xf32, #tpu.memory_space<vmem>>, vector<8x288xf32>
    %c32 = arith.constant 32 : index
    %c0_274 = arith.constant 0 : index
    %173 = vector.load %arg6[%c32, %c0_274] : memref<72x288xf32, #tpu.memory_space<vmem>>, vector<8x288xf32>
    tpu.vector_store %arg6[%c32, %c0_274], %172 {strides = array<i32>} : memref<72x288xf32, #tpu.memory_space<vmem>>, vector<8x288xf32>,
    %c0_275 = arith.constant 0 : index
    %c20 = arith.constant 20 : index
    %174 = vector.load %arg5[%c0_275, %c20] : memref<8x326xf32, #tpu.memory_space<vmem>>, vector<8x288xf32>
    %c40 = arith.constant 40 : index
    %c0_276 = arith.constant 0 : index
    %175 = vector.load %arg6[%c40, %c0_276] : memref<72x288xf32, #tpu.memory_space<vmem>>, vector<8x288xf32>
    tpu.vector_store %arg6[%c40, %c0_276], %174 {strides = array<i32>} : memref<72x288xf32, #tpu.memory_space<vmem>>, vector<8x288xf32>,
    %c0_277 = arith.constant 0 : index
    %c36_278 = arith.constant 36 : index
    %176 = vector.load %arg5[%c0_277, %c36_278] : memref<8x326xf32, #tpu.memory_space<vmem>>, vector<8x288xf32>
    %c48 = arith.constant 48 : index
    %c0_279 = arith.constant 0 : index
    %177 = vector.load %arg6[%c48, %c0_279] : memref<72x288xf32, #tpu.memory_space<vmem>>, vector<8x288xf32>
    tpu.vector_store %arg6[%c48, %c0_279], %176 {strides = array<i32>} : memref<72x288xf32, #tpu.memory_space<vmem>>, vector<8x288xf32>,
    %c0_280 = arith.constant 0 : index
    %c37_281 = arith.constant 37 : index
    %178 = vector.load %arg5[%c0_280, %c37_281] : memref<8x326xf32, #tpu.memory_space<vmem>>, vector<8x288xf32>
    %c56 = arith.constant 56 : index
    %c0_282 = arith.constant 0 : index
    %179 = vector.load %arg6[%c56, %c0_282] : memref<72x288xf32, #tpu.memory_space<vmem>>, vector<8x288xf32>
    tpu.vector_store %arg6[%c56, %c0_282], %178 {strides = array<i32>} : memref<72x288xf32, #tpu.memory_space<vmem>>, vector<8x288xf32>,
    %c0_283 = arith.constant 0 : index
    %c38 = arith.constant 38 : index
    %180 = vector.load %arg5[%c0_283, %c38] : memref<8x326xf32, #tpu.memory_space<vmem>>, vector<8x288xf32>
    %c64 = arith.constant 64 : index
    %c0_284 = arith.constant 0 : index
    %181 = vector.load %arg6[%c64, %c0_284] : memref<72x288xf32, #tpu.memory_space<vmem>>, vector<8x288xf32>
    tpu.vector_store %arg6[%c64, %c0_284], %180 {strides = array<i32>} : memref<72x288xf32, #tpu.memory_space<vmem>>, vector<8x288xf32>,
    %c0_285 = arith.constant 0 : index
    %c0_286 = arith.constant 0 : index
    %182 = vector.load %arg2[%c0_285, %c0_286] : memref<8x72xf32, #tpu.memory_space<vmem>>, vector<8x72xf32>
    %c0_287 = arith.constant 0 : index
    %c0_288 = arith.constant 0 : index
    %183 = vector.load %arg6[%c0_287, %c0_288] : memref<72x288xf32, #tpu.memory_space<vmem>>, vector<72x288xf32>
    %cst_289 = arith.constant dense<0.000000e+00> : vector<8x288xf32>
    %184 = tpu.matmul %182, %183, %cst_289 {dimension_numbers = #tpu.dot_dimension_numbers<[1], [0], [0], [1], [0, 0, 1, 1], [], []>} : vector<8x72xf32>, vector<72x288xf32>, vector<8x288xf32> -> vector<8x288xf32>
    %c0_290 = arith.constant 0 : index
    %c0_291 = arith.constant 0 : index
    %185 = vector.load %arg3[%c0_290, %c0_291] : memref<8x1xf32, #tpu.memory_space<vmem>>, vector<8x1xf32>
    %186 = vector.broadcast %185 : vector<8x1xf32> to vector<8x288xf32>
    %187 = arith.addf %184, %186 : vector<8x288xf32>
    %cst_292 = arith.constant 0.000000e+00 : f32
    %188 = vector.broadcast %cst_292 : f32 to vector<8x288xf32>
    %189 = arith.cmpf oge, %187, %188 : vector<8x288xf32>
    %cst_293 = arith.constant 0.00999999977 : f32
    %190 = vector.broadcast %cst_293 : f32 to vector<8x288xf32>
    %191 = arith.mulf %190, %187 : vector<8x288xf32>
    %192 = arith.select %189, %187, %191 : vector<8x288xi1>, vector<8x288xf32>
    %c0_294 = arith.constant 0 : index
    %c0_295 = arith.constant 0 : index
    %193 = vector.load %arg7[%c0_294, %c0_295] : memref<8x288xf32, #tpu.memory_space<vmem>>, vector<8x288xf32>
    tpu.vector_store %arg7[%c0_294, %c0_295], %192 {strides = array<i32>} : memref<8x288xf32, #tpu.memory_space<vmem>>, vector<8x288xf32>,
    %c0_296 = arith.constant 0 : index
    %c0_297 = arith.constant 0 : index
    %194 = vector.load %arg7[%c0_296, %c0_297] : memref<8x288xf32, #tpu.memory_space<vmem>>, vector<8x16xf32>
    %195 = arith.truncf %194 : vector<8x16xf32> to vector<8x16xbf16>
    %c0_298 = arith.constant 0 : index
    %c0_299 = arith.constant 0 : index
    %c0_300 = arith.constant 0 : index
    %196 = vector.load %arg4[%c0_298, %c0_299, %c0_300] : memref<1x8x256xbf16, #tpu.memory_space<vmem>>, vector<1x8x16xbf16>
    %197 = vector.shape_cast %196 : vector<1x8x16xbf16> to vector<8x16xbf16>
    %198 = vector.shape_cast %195 : vector<8x16xbf16> to vector<1x8x16xbf16>
    tpu.vector_store %arg4[%c0_298, %c0_299, %c0_300], %198 {strides = array<i32>} : memref<1x8x256xbf16, #tpu.memory_space<vmem>>, vector<1x8x16xbf16>,
    %c0_301 = arith.constant 0 : index
    %c18_302 = arith.constant 18 : index
    %199 = vector.load %arg7[%c0_301, %c18_302] : memref<8x288xf32, #tpu.memory_space<vmem>>, vector<8x16xf32>
    %200 = arith.truncf %199 : vector<8x16xf32> to vector<8x16xbf16>
    %c0_303 = arith.constant 0 : index
    %c0_304 = arith.constant 0 : index
    %c16_305 = arith.constant 16 : index
    %201 = vector.load %arg4[%c0_303, %c0_304, %c16_305] : memref<1x8x256xbf16, #tpu.memory_space<vmem>>, vector<1x8x16xbf16>
    %202 = vector.shape_cast %201 : vector<1x8x16xbf16> to vector<8x16xbf16>
    %203 = vector.shape_cast %200 : vector<8x16xbf16> to vector<1x8x16xbf16>
    tpu.vector_store %arg4[%c0_303, %c0_304, %c16_305], %203 {strides = array<i32>} : memref<1x8x256xbf16, #tpu.memory_space<vmem>>, vector<1x8x16xbf16>,
    %c0_306 = arith.constant 0 : index
    %c36_307 = arith.constant 36 : index
    %204 = vector.load %arg7[%c0_306, %c36_307] : memref<8x288xf32, #tpu.memory_space<vmem>>, vector<8x16xf32>
    %205 = arith.truncf %204 : vector<8x16xf32> to vector<8x16xbf16>
    %c0_308 = arith.constant 0 : index
    %c0_309 = arith.constant 0 : index
    %c32_310 = arith.constant 32 : index
    %206 = vector.load %arg4[%c0_308, %c0_309, %c32_310] : memref<1x8x256xbf16, #tpu.memory_space<vmem>>, vector<1x8x16xbf16>
    %207 = vector.shape_cast %206 : vector<1x8x16xbf16> to vector<8x16xbf16>
    %208 = vector.shape_cast %205 : vector<8x16xbf16> to vector<1x8x16xbf16>
    tpu.vector_store %arg4[%c0_308, %c0_309, %c32_310], %208 {strides = array<i32>} : memref<1x8x256xbf16, #tpu.memory_space<vmem>>, vector<1x8x16xbf16>,
    %c0_311 = arith.constant 0 : index
    %c54_312 = arith.constant 54 : index
    %209 = vector.load %arg7[%c0_311, %c54_312] : memref<8x288xf32, #tpu.memory_space<vmem>>, vector<8x16xf32>
    %210 = arith.truncf %209 : vector<8x16xf32> to vector<8x16xbf16>
    %c0_313 = arith.constant 0 : index
    %c0_314 = arith.constant 0 : index
    %c48_315 = arith.constant 48 : index
    %211 = vector.load %arg4[%c0_313, %c0_314, %c48_315] : memref<1x8x256xbf16, #tpu.memory_space<vmem>>, vector<1x8x16xbf16>
    %212 = vector.shape_cast %211 : vector<1x8x16xbf16> to vector<8x16xbf16>
    %213 = vector.shape_cast %210 : vector<8x16xbf16> to vector<1x8x16xbf16>
    tpu.vector_store %arg4[%c0_313, %c0_314, %c48_315], %213 {strides = array<i32>} : memref<1x8x256xbf16, #tpu.memory_space<vmem>>, vector<1x8x16xbf16>,
    %c0_316 = arith.constant 0 : index
    %c72_317 = arith.constant 72 : index
    %214 = vector.load %arg7[%c0_316, %c72_317] : memref<8x288xf32, #tpu.memory_space<vmem>>, vector<8x16xf32>
    %215 = arith.truncf %214 : vector<8x16xf32> to vector<8x16xbf16>
    %c0_318 = arith.constant 0 : index
    %c0_319 = arith.constant 0 : index
    %c64_320 = arith.constant 64 : index
    %216 = vector.load %arg4[%c0_318, %c0_319, %c64_320] : memref<1x8x256xbf16, #tpu.memory_space<vmem>>, vector<1x8x16xbf16>
    %217 = vector.shape_cast %216 : vector<1x8x16xbf16> to vector<8x16xbf16>
    %218 = vector.shape_cast %215 : vector<8x16xbf16> to vector<1x8x16xbf16>
    tpu.vector_store %arg4[%c0_318, %c0_319, %c64_320], %218 {strides = array<i32>} : memref<1x8x256xbf16, #tpu.memory_space<vmem>>, vector<1x8x16xbf16>,
    %c0_321 = arith.constant 0 : index
    %c90_322 = arith.constant 90 : index
    %219 = vector.load %arg7[%c0_321, %c90_322] : memref<8x288xf32, #tpu.memory_space<vmem>>, vector<8x16xf32>
    %220 = arith.truncf %219 : vector<8x16xf32> to vector<8x16xbf16>
    %c0_323 = arith.constant 0 : index
    %c0_324 = arith.constant 0 : index
    %c80 = arith.constant 80 : index
    %221 = vector.load %arg4[%c0_323, %c0_324, %c80] : memref<1x8x256xbf16, #tpu.memory_space<vmem>>, vector<1x8x16xbf16>
    %222 = vector.shape_cast %221 : vector<1x8x16xbf16> to vector<8x16xbf16>
    %223 = vector.shape_cast %220 : vector<8x16xbf16> to vector<1x8x16xbf16>
    tpu.vector_store %arg4[%c0_323, %c0_324, %c80], %223 {strides = array<i32>} : memref<1x8x256xbf16, #tpu.memory_space<vmem>>, vector<1x8x16xbf16>,
    %c0_325 = arith.constant 0 : index
    %c108_326 = arith.constant 108 : index
    %224 = vector.load %arg7[%c0_325, %c108_326] : memref<8x288xf32, #tpu.memory_space<vmem>>, vector<8x16xf32>
    %225 = arith.truncf %224 : vector<8x16xf32> to vector<8x16xbf16>
    %c0_327 = arith.constant 0 : index
    %c0_328 = arith.constant 0 : index
    %c96 = arith.constant 96 : index
    %226 = vector.load %arg4[%c0_327, %c0_328, %c96] : memref<1x8x256xbf16, #tpu.memory_space<vmem>>, vector<1x8x16xbf16>
    %227 = vector.shape_cast %226 : vector<1x8x16xbf16> to vector<8x16xbf16>
    %228 = vector.shape_cast %225 : vector<8x16xbf16> to vector<1x8x16xbf16>
    tpu.vector_store %arg4[%c0_327, %c0_328, %c96], %228 {strides = array<i32>} : memref<1x8x256xbf16, #tpu.memory_space<vmem>>, vector<1x8x16xbf16>,
    %c0_329 = arith.constant 0 : index
    %c126_330 = arith.constant 126 : index
    %229 = vector.load %arg7[%c0_329, %c126_330] : memref<8x288xf32, #tpu.memory_space<vmem>>, vector<8x16xf32>
    %230 = arith.truncf %229 : vector<8x16xf32> to vector<8x16xbf16>
    %c0_331 = arith.constant 0 : index
    %c0_332 = arith.constant 0 : index
    %c112 = arith.constant 112 : index
    %231 = vector.load %arg4[%c0_331, %c0_332, %c112] : memref<1x8x256xbf16, #tpu.memory_space<vmem>>, vector<1x8x16xbf16>
    %232 = vector.shape_cast %231 : vector<1x8x16xbf16> to vector<8x16xbf16>
    %233 = vector.shape_cast %230 : vector<8x16xbf16> to vector<1x8x16xbf16>
    tpu.vector_store %arg4[%c0_331, %c0_332, %c112], %233 {strides = array<i32>} : memref<1x8x256xbf16, #tpu.memory_space<vmem>>, vector<1x8x16xbf16>,
    %c0_333 = arith.constant 0 : index
    %c144_334 = arith.constant 144 : index
    %234 = vector.load %arg7[%c0_333, %c144_334] : memref<8x288xf32, #tpu.memory_space<vmem>>, vector<8x16xf32>
    %235 = arith.truncf %234 : vector<8x16xf32> to vector<8x16xbf16>
    %c0_335 = arith.constant 0 : index
    %c0_336 = arith.constant 0 : index
    %c128 = arith.constant 128 : index
    %236 = vector.load %arg4[%c0_335, %c0_336, %c128] : memref<1x8x256xbf16, #tpu.memory_space<vmem>>, vector<1x8x16xbf16>
    %237 = vector.shape_cast %236 : vector<1x8x16xbf16> to vector<8x16xbf16>
    %238 = vector.shape_cast %235 : vector<8x16xbf16> to vector<1x8x16xbf16>
    tpu.vector_store %arg4[%c0_335, %c0_336, %c128], %238 {strides = array<i32>} : memref<1x8x256xbf16, #tpu.memory_space<vmem>>, vector<1x8x16xbf16>,
    %c0_337 = arith.constant 0 : index
    %c162_338 = arith.constant 162 : index
    %239 = vector.load %arg7[%c0_337, %c162_338] : memref<8x288xf32, #tpu.memory_space<vmem>>, vector<8x16xf32>
    %240 = arith.truncf %239 : vector<8x16xf32> to vector<8x16xbf16>
    %c0_339 = arith.constant 0 : index
    %c0_340 = arith.constant 0 : index
    %c144_341 = arith.constant 144 : index
    %241 = vector.load %arg4[%c0_339, %c0_340, %c144_341] : memref<1x8x256xbf16, #tpu.memory_space<vmem>>, vector<1x8x16xbf16>
    %242 = vector.shape_cast %241 : vector<1x8x16xbf16> to vector<8x16xbf16>
    %243 = vector.shape_cast %240 : vector<8x16xbf16> to vector<1x8x16xbf16>
    tpu.vector_store %arg4[%c0_339, %c0_340, %c144_341], %243 {strides = array<i32>} : memref<1x8x256xbf16, #tpu.memory_space<vmem>>, vector<1x8x16xbf16>,
    %c0_342 = arith.constant 0 : index
    %c180_343 = arith.constant 180 : index
    %244 = vector.load %arg7[%c0_342, %c180_343] : memref<8x288xf32, #tpu.memory_space<vmem>>, vector<8x16xf32>
    %245 = arith.truncf %244 : vector<8x16xf32> to vector<8x16xbf16>
    %c0_344 = arith.constant 0 : index
    %c0_345 = arith.constant 0 : index
    %c160 = arith.constant 160 : index
    %246 = vector.load %arg4[%c0_344, %c0_345, %c160] : memref<1x8x256xbf16, #tpu.memory_space<vmem>>, vector<1x8x16xbf16>
    %247 = vector.shape_cast %246 : vector<1x8x16xbf16> to vector<8x16xbf16>
    %248 = vector.shape_cast %245 : vector<8x16xbf16> to vector<1x8x16xbf16>
    tpu.vector_store %arg4[%c0_344, %c0_345, %c160], %248 {strides = array<i32>} : memref<1x8x256xbf16, #tpu.memory_space<vmem>>, vector<1x8x16xbf16>,
    %c0_346 = arith.constant 0 : index
    %c198_347 = arith.constant 198 : index
    %249 = vector.load %arg7[%c0_346, %c198_347] : memref<8x288xf32, #tpu.memory_space<vmem>>, vector<8x16xf32>
    %250 = arith.truncf %249 : vector<8x16xf32> to vector<8x16xbf16>
    %c0_348 = arith.constant 0 : index
    %c0_349 = arith.constant 0 : index
    %c176 = arith.constant 176 : index
    %251 = vector.load %arg4[%c0_348, %c0_349, %c176] : memref<1x8x256xbf16, #tpu.memory_space<vmem>>, vector<1x8x16xbf16>
    %252 = vector.shape_cast %251 : vector<1x8x16xbf16> to vector<8x16xbf16>
    %253 = vector.shape_cast %250 : vector<8x16xbf16> to vector<1x8x16xbf16>
    tpu.vector_store %arg4[%c0_348, %c0_349, %c176], %253 {strides = array<i32>} : memref<1x8x256xbf16, #tpu.memory_space<vmem>>, vector<1x8x16xbf16>,
    %c0_350 = arith.constant 0 : index
    %c216_351 = arith.constant 216 : index
    %254 = vector.load %arg7[%c0_350, %c216_351] : memref<8x288xf32, #tpu.memory_space<vmem>>, vector<8x16xf32>
    %255 = arith.truncf %254 : vector<8x16xf32> to vector<8x16xbf16>
    %c0_352 = arith.constant 0 : index
    %c0_353 = arith.constant 0 : index
    %c192 = arith.constant 192 : index
    %256 = vector.load %arg4[%c0_352, %c0_353, %c192] : memref<1x8x256xbf16, #tpu.memory_space<vmem>>, vector<1x8x16xbf16>
    %257 = vector.shape_cast %256 : vector<1x8x16xbf16> to vector<8x16xbf16>
    %258 = vector.shape_cast %255 : vector<8x16xbf16> to vector<1x8x16xbf16>
    tpu.vector_store %arg4[%c0_352, %c0_353, %c192], %258 {strides = array<i32>} : memref<1x8x256xbf16, #tpu.memory_space<vmem>>, vector<1x8x16xbf16>,
    %c0_354 = arith.constant 0 : index
    %c234_355 = arith.constant 234 : index
    %259 = vector.load %arg7[%c0_354, %c234_355] : memref<8x288xf32, #tpu.memory_space<vmem>>, vector<8x16xf32>
    %260 = arith.truncf %259 : vector<8x16xf32> to vector<8x16xbf16>
    %c0_356 = arith.constant 0 : index
    %c0_357 = arith.constant 0 : index
    %c208 = arith.constant 208 : index
    %261 = vector.load %arg4[%c0_356, %c0_357, %c208] : memref<1x8x256xbf16, #tpu.memory_space<vmem>>, vector<1x8x16xbf16>
    %262 = vector.shape_cast %261 : vector<1x8x16xbf16> to vector<8x16xbf16>
    %263 = vector.shape_cast %260 : vector<8x16xbf16> to vector<1x8x16xbf16>
    tpu.vector_store %arg4[%c0_356, %c0_357, %c208], %263 {strides = array<i32>} : memref<1x8x256xbf16, #tpu.memory_space<vmem>>, vector<1x8x16xbf16>,
    %c0_358 = arith.constant 0 : index
    %c252_359 = arith.constant 252 : index
    %264 = vector.load %arg7[%c0_358, %c252_359] : memref<8x288xf32, #tpu.memory_space<vmem>>, vector<8x16xf32>
    %265 = arith.truncf %264 : vector<8x16xf32> to vector<8x16xbf16>
    %c0_360 = arith.constant 0 : index
    %c0_361 = arith.constant 0 : index
    %c224 = arith.constant 224 : index
    %266 = vector.load %arg4[%c0_360, %c0_361, %c224] : memref<1x8x256xbf16, #tpu.memory_space<vmem>>, vector<1x8x16xbf16>
    %267 = vector.shape_cast %266 : vector<1x8x16xbf16> to vector<8x16xbf16>
    %268 = vector.shape_cast %265 : vector<8x16xbf16> to vector<1x8x16xbf16>
    tpu.vector_store %arg4[%c0_360, %c0_361, %c224], %268 {strides = array<i32>} : memref<1x8x256xbf16, #tpu.memory_space<vmem>>, vector<1x8x16xbf16>,
    %c0_362 = arith.constant 0 : index
    %c270_363 = arith.constant 270 : index
    %269 = vector.load %arg7[%c0_362, %c270_363] : memref<8x288xf32, #tpu.memory_space<vmem>>, vector<8x16xf32>
    %270 = arith.truncf %269 : vector<8x16xf32> to vector<8x16xbf16>
    %c0_364 = arith.constant 0 : index
    %c0_365 = arith.constant 0 : index
    %c240 = arith.constant 240 : index
    %271 = vector.load %arg4[%c0_364, %c0_365, %c240] : memref<1x8x256xbf16, #tpu.memory_space<vmem>>, vector<1x8x16xbf16>
    %272 = vector.shape_cast %271 : vector<1x8x16xbf16> to vector<8x16xbf16>
    %273 = vector.shape_cast %270 : vector<8x16xbf16> to vector<1x8x16xbf16>
    tpu.vector_store %arg4[%c0_364, %c0_365, %c240], %273 {strides = array<i32>} : memref<1x8x256xbf16, #tpu.memory_space<vmem>>, vector<1x8x16xbf16>,
    return
  }
  func.func @transform_0(%arg0: i32) -> (i32, i32, i32, i32) {
    %c0_i32 = arith.constant 0 : i32
    %c0_i32_0 = arith.constant 0 : i32
    %c0_i32_1 = arith.constant 0 : i32
    %c0_i32_2 = arith.constant 0 : i32
    return %arg0, %c0_i32, %c0_i32_0, %c0_i32_1 : i32, i32, i32, i32
  }
  func.func @transform_1(%arg0: i32) -> (i32, i32) {
    %c0_i32 = arith.constant 0 : i32
    %c0_i32_0 = arith.constant 0 : i32
    %c0_i32_1 = arith.constant 0 : i32
    return %c0_i32, %c0_i32_0 : i32, i32
  }
  func.func @transform_2(%arg0: i32) -> (i32, i32) {
    %c0_i32 = arith.constant 0 : i32
    %c0_i32_0 = arith.constant 0 : i32
    %c0_i32_1 = arith.constant 0 : i32
    return %c0_i32, %c0_i32_0 : i32, i32
  }
  func.func @transform_3(%arg0: i32) -> (i32, i32, i32) {
    %c0_i32 = arith.constant 0 : i32
    %c0_i32_0 = arith.constant 0 : i32
    %c0_i32_1 = arith.constant 0 : i32
    return %arg0, %c0_i32, %c0_i32_0 : i32, i32, i32
  }
}

</mosaic_0001>

<llo_original>
// kernel: convd_forward.1
$region0: #{convd_forward.1}
  #allocation0 [shape = 'u32[]', space=smem, size = 0x4, offset = 0x4, fixed_abs, tag = 'smem constant byte address 0x4 - core index']
  #allocation1 [shape = 'u32[144,128]{1,0:T(1,128)}', space=vmem, size = 0x12000, scoped, tag = 'internal scratch']
  #allocation2 [shape = 'f32[8,326]{1,0:T(8,128)}', space=vmem, size = 0x3000, scoped, tag = 'scratch operand']
  #allocation3 [shape = 'f32[72,288]{1,0:T(8,128)}', space=vmem, size = 0x1b000, scoped, tag = 'scratch operand']
  #allocation4 [shape = 'f32[8,288]{1,0:T(8,128)}', space=vmem, size = 0x3000, scoped, tag = 'scratch operand']
  %s0 = inlined_call_operand.vmem [shape: f32[2,4,16,16], index: 0, kind: input, shape index: {}]
  %s1 = inlined_call_operand.vmem [shape: f32[8,72], index: 1, kind: input, shape index: {}]
  %s2 = inlined_call_operand.vmem [shape: f32[8,1], index: 2, kind: input, shape index: {}]
  %s3 = inlined_call_operand.vmem [shape: bf16[2,8,256], index: 3, kind: output, shape index: {}]
  %s4 = sld [smem:[#allocation0]]
  $region45: #{convd_forward.1} parent=0
    _
  %s6 = ssub.s32 1, %s4
  %s7 = scalar_select 0, %s6, %s4
  loop: start=0, step=1, limit=4
  $region2: #{convd_forward.1} parent=0 // loop_pre_header
    _
  $region3: #{convd_forward.1} parent=0 // loop_header
    %s9 = sphi 0, %s13
    %p10 = scmp.ge.s32.totalorder %s9, 4
    %s19 = sphi 0, %s21
    %s22 = sphi 0, %s19
    %s23 = sphi 0, %s22
    %s39 = sphi 0, %s23
    %s43 = sphi 0, %s43
    %s45 = sphi 0, %s43
    %s46 = sphi 0, %s45
    %s60 = sphi 0, %s46
    %s64 = sphi 0, %s64
    %s66 = sphi 0, %s64
    %s67 = sphi 0, %s66
    %s81 = sphi 0, %s67
    %s87 = sphi 0, %s89
    %s90 = sphi 0, %s87
    %s91 = sphi 0, %s90
    %s107 = sphi 0, %s91
  $region4: #{convd_forward.1} parent=0 // loop_header_branch
    %12 = sbr.rel (%p10) target = $region8
  $region5: #{convd_forward.1} parent=0 // loop_body
    %s14 = ssub.s32 %s9, 1
    %s15 = ssub.s32 %s9, 2
    %s16 = sadd.s32 %s9, 1
    %s17 = ssub.s32 %s9, %s16
    %p18 = scmp.eq.s32.totalorder %s17, 0
    %s20 = sadd.s32 %s19, 1
    %s21 = scalar_select %p18, %s19, %s20
    %p24 = pneg %p18
    %p25 = scmp.eq.s32.totalorder %s9, 1
    %p26 = por %p24, %p25
    %p27 = scmp.ne.s32.totalorder %s19, %s22
    %p28 = scmp.eq.s32.totalorder %s9, 0
    %p29 = por %p27, %p28
    %p30 = scmp.ne.s32.totalorder %s19, %s22
    %p31 = scmp.eq.s32.totalorder %s14, 1
    %p32 = por %p30, %p31
    %p33 = scmp.ne.s32.totalorder %s22, %s23
    %p34 = scmp.eq.s32.totalorder %s14, 0
    %p35 = por %p33, %p34
    %p36 = scmp.ne.s32.totalorder %s22, %s23
    %p37 = scmp.eq.s32.totalorder %s15, 1
    %p38 = por %p36, %p37
    %p40 = scmp.ne.s32.totalorder %s23, %s39
    %p41 = scmp.eq.s32.totalorder %s15, 0
    %p42 = por %p40, %p41
    %s44 = sadd.s32 %s43, 1
    %p47 = scmp.eq.s32.totalorder %s9, 1
    %p48 = scmp.ne.s32.totalorder %s43, %s45
    %p49 = scmp.eq.s32.totalorder %s9, 0
    %p50 = por %p48, %p49
    %p51 = scmp.ne.s32.totalorder %s43, %s45
    %p52 = scmp.eq.s32.totalorder %s14, 1
    %p53 = por %p51, %p52
    %p54 = scmp.ne.s32.totalorder %s45, %s46
    %p55 = scmp.eq.s32.totalorder %s14, 0
    %p56 = por %p54, %p55
    %p57 = scmp.ne.s32.totalorder %s45, %s46
    %p58 = scmp.eq.s32.totalorder %s15, 1
    %p59 = por %p57, %p58
    %p61 = scmp.ne.s32.totalorder %s46, %s60
    %p62 = scmp.eq.s32.totalorder %s15, 0
    %p63 = por %p61, %p62
    %s65 = sadd.s32 %s64, 1
    %p68 = scmp.eq.s32.totalorder %s9, 1
    %p69 = scmp.ne.s32.totalorder %s64, %s66
    %p70 = scmp.eq.s32.totalorder %s9, 0
    %p71 = por %p69, %p70
    %p72 = scmp.ne.s32.totalorder %s64, %s66
    %p73 = scmp.eq.s32.totalorder %s14, 1
    %p74 = por %p72, %p73
    %p75 = scmp.ne.s32.totalorder %s66, %s67
    %p76 = scmp.eq.s32.totalorder %s14, 0
    %p77 = por %p75, %p76
    %p78 = scmp.ne.s32.totalorder %s66, %s67
    %p79 = scmp.eq.s32.totalorder %s15, 1
    %p80 = por %p78, %p79
    %p82 = scmp.ne.s32.totalorder %s67, %s81
    %p83 = scmp.eq.s32.totalorder %s15, 0
    %p84 = por %p82, %p83
    %s85 = ssub.s32 %s9, %s16
    %p86 = scmp.eq.s32.totalorder %s85, 0
    %s88 = sadd.s32 %s87, 1
    %s89 = scalar_select %p86, %s87, %s88
    %p92 = pneg %p86
    %p93 = scmp.eq.s32.totalorder %s9, 1
    %p94 = por %p92, %p93
    %p95 = scmp.ne.s32.totalorder %s87, %s90
    %p96 = scmp.eq.s32.totalorder %s9, 0
    %p97 = por %p95, %p96
    %p98 = scmp.ne.s32.totalorder %s87, %s90
    %p99 = scmp.eq.s32.totalorder %s14, 1
    %p100 = por %p98, %p99
    %p101 = scmp.ne.s32.totalorder %s90, %s91
    %p102 = scmp.eq.s32.totalorder %s14, 0
    %p103 = por %p101, %p102
    %p104 = scmp.ne.s32.totalorder %s90, %s91
    %p105 = scmp.eq.s32.totalorder %s15, 1
    %p106 = por %p104, %p105
    %p108 = scmp.ne.s32.totalorder %s91, %s107
    %p109 = scmp.eq.s32.totalorder %s15, 0
    %p110 = por %p108, %p109
    %p111 = scmp.le.s32.totalorder 1, %s9
    %p112 = scmp.lt.s32.totalorder %s9, 3
    %p113 = pnand %p111, %p112
    %p114 = pneg %p113
    // Predicated region
    $region9: #{convd_forward.1} parent=5 // pred_check
      _
    $region10: #{convd_forward.1} parent=5 // pred_check_branch
      %116 = sbr.rel (%p113) target = $region12
    $region11: #{convd_forward.1} parent=5 // pred_region
      %s117 = ssub.s32 %s9, 1
      // Predicated region
      $region13: #{convd_forward.1} parent=11 // pred_check
        %p118 = pneg %p56
      $region14: #{convd_forward.1} parent=11 // pred_check_branch
        %120 = sbr.rel (%p118) target = $region16
      $region15: #{convd_forward.1} parent=11 // pred_region
        _
      $region16: #{convd_forward.1} parent=11 // pred_fallthru
        _
      // Predicated region
      $region17: #{convd_forward.1} parent=11 // pred_check
        %p121 = pneg %p77
      $region18: #{convd_forward.1} parent=11 // pred_check_branch
        %123 = sbr.rel (%p121) target = $region20
      $region19: #{convd_forward.1} parent=11 // pred_region
        _
      $region20: #{convd_forward.1} parent=11 // pred_fallthru
        _
    $region12: #{convd_forward.1} parent=5 // pred_fallthru
      _
    %p124 = scmp.lt.s32.totalorder %s9, 2
    // Predicated region
    $region21: #{convd_forward.1} parent=5 // pred_check
      %p125 = pneg %p124
    $region22: #{convd_forward.1} parent=5 // pred_check_branch
      %127 = sbr.rel (%p125) target = $region24
    $region23: #{convd_forward.1} parent=5 // pred_region
      // Predicated region
      $region25: #{convd_forward.1} parent=23 // pred_check
        %p128 = pneg %p29
      $region26: #{convd_forward.1} parent=23 // pred_check_branch
        %130 = sbr.rel (%p128) target = $region28
      $region27: #{convd_forward.1} parent=23 // pred_region
        %p131 = scmp.lt.s32.totalorder %s9, 1
        %s132 = scalar_select %p131, %s9, 1
        %s133 = smul.addr %s132, 8
        %s134 = smul.addr %s133, 8
        %s135 = scalar_lea.vmem %s0, %s134
      $region28: #{convd_forward.1} parent=23 // pred_fallthru
        _
    $region24: #{convd_forward.1} parent=5 // pred_fallthru
      _
    %p136 = scmp.le.s32.totalorder 1, %s9
    %p137 = scmp.lt.s32.totalorder %s9, 3
    %p138 = pnand %p136, %p137
    %p139 = pneg %p138
    // Predicated region
    $region29: #{convd_forward.1} parent=5 // pred_check
      _
    $region30: #{convd_forward.1} parent=5 // pred_check_branch
      %141 = sbr.rel (%p138) target = $region32
    $region31: #{convd_forward.1} parent=5 // pred_region
      %s142 = ssub.s32 %s9, 1
      %p143 = scmp.lt.s32.totalorder %s14, 1
      %s144 = scalar_select %p143, %s14, 1
      %s145 = smul.addr %s144, 8
      %s146 = smul.addr %s145, 8
      %s147 = scalar_lea.vmem %s0, %s146
      %p148 = pneg %p35
      %p149 = pneg %p32
      %p150 = pneg %p56
      %p151 = pneg %p53
      %p152 = pneg %p77
      %p153 = pneg %p74
      %p154 = pneg %p103
      %p155 = pneg %p100
      %p156 = scmp.lt.s32.totalorder %s14, 1
      %s157 = scalar_select %p156, %s14, 1
      %s158 = smul.addr %s157, 2
      %s159 = smul.addr %s158, 4
      %s160 = scalar_lea.vmem %s3, %s159
      %p161 = scmp.lt.s32.totalorder %s14, 1
      %s162 = scalar_select %p161, %s14, 1
      %s163 = smul.addr %s162, 8
      %s164 = smul.addr %s163, 8
      %s165 = scalar_lea.vmem %s0, %s164
      %p166 = scmp.lt.s32.totalorder %s14, 1
      %s167 = scalar_select %p166, %s14, 1
      %s168 = smul.addr %s167, 2
      %s169 = smul.addr %s168, 4
      %s170 = scalar_lea.vmem %s3, %s169
      %171 = vst [vmem:[#allocation2] sm:$0xff] 0.0
      %172 = vst [vmem:[#allocation2 + $0x8] sm:$0xff] 0.0
      %vm173 = vcmask 572416
      %174 = vst.msk [vmem:[#allocation2 + $0x10] sm:$0xff] %vm173, 0.0
      %v175 = vld [vmem:[%s165 + $0x1] sm:$0x1]
      %v176 = vld [vmem:[%s165 + $0x11] sm:$0x1]
      %v177 = vld [vmem:[%s165 + $0x21] sm:$0x1]
      %v178 = vld [vmem:[%s165 + $0x31] sm:$0x1]
      %v183 = vrot.slane %v176, 7
      %vm184 = vcmask 1041409
      %v185 = vsel %vm184, %v183, %v175
      %v186 = vrot.slane %v177, 6
      %vm187 = vcmask 1042434
      %v188 = vsel %vm187, %v186, %v185
      %v189 = vrot.slane %v178, 5
      %vm190 = vcmask 1043459
      %v191 = vsel %vm190, %v189, %v188
      %192 = vrot.lane.b32.xlu0 %v191, 1
      %v193 = vpop.permute.xlu0 %192
      %vm195 = vcmask 134152
      %196 = vst.msk [vmem:[#allocation2] sm:$0xf] %vm195, %v193
      %v197 = vld [vmem:[%s165 + $0x1] sm:$0x1]
      %v198 = vld [vmem:[%s165 + $0x11] sm:$0x1]
      %v199 = vld [vmem:[%s165 + $0x21] sm:$0x1]
      %v200 = vld [vmem:[%s165 + $0x31] sm:$0x1]
      %v205 = vrot.slane %v198, 7
      %v206 = vsel %vm184, %v205, %v197
      %v207 = vrot.slane %v199, 6
      %v208 = vsel %vm187, %v207, %v206
      %v209 = vrot.slane %v200, 5
      %v210 = vsel %vm190, %v209, %v208
      %211 = vrot.lane.b32.xlu0 %v210, 127
      %v212 = vpop.permute.xlu0 %211
      %vm214 = vcmask 3072
      %215 = vst.msk [vmem:[#allocation2] sm:$0xf] %vm214, %v212
      %v216 = vld [vmem:[%s165 + $0x1] sm:$0x1]
      %v217 = vld [vmem:[%s165 + $0x11] sm:$0x1]
      %v218 = vld [vmem:[%s165 + $0x21] sm:$0x1]
      %v219 = vld [vmem:[%s165 + $0x31] sm:$0x1]
      %v224 = vrot.slane %v217, 7
      %v225 = vsel %vm184, %v224, %v216
      %v226 = vrot.slane %v218, 6
      %v227 = vsel %vm187, %v226, %v225
      %v228 = vrot.slane %v219, 5
      %v229 = vsel %vm190, %v228, %v227
      %230 = vrot.lane.b32.xlu0 %v229, 3
      %v231 = vpop.permute.xlu0 %230
      %vm233 = vcmask 142472
      %234 = vst.msk [vmem:[#allocation2] sm:$0xf] %vm233, %v231
      %v235 = vld [vmem:[%s165] sm:$0x1]
      %v236 = vld [vmem:[%s165 + $0x10] sm:$0x1]
      %v237 = vld [vmem:[%s165 + $0x20] sm:$0x1]
      %v238 = vld [vmem:[%s165 + $0x30] sm:$0x1]
      %v243 = vrot.slane %v236, 7
      %v244 = vsel %vm184, %v243, %v235
      %v245 = vrot.slane %v237, 6
      %v246 = vsel %vm187, %v245, %v244
      %v247 = vrot.slane %v238, 5
      %v248 = vsel %vm190, %v247, %v246
      %249 = vrot.lane.b32.xlu0 %v248, 19
      %v250 = vpop.permute.xlu0 %249
      %vm252 = vcmask 281752
      %253 = vst.msk [vmem:[#allocation2] sm:$0xf] %vm252, %v250
      %v254 = vld [vmem:[%s165] sm:$0x1]
      %v255 = vld [vmem:[%s165 + $0x10] sm:$0x1]
      %v256 = vld [vmem:[%s165 + $0x20] sm:$0x1]
      %v257 = vld [vmem:[%s165 + $0x30] sm:$0x1]
      %v262 = vrot.slane %v255, 7
      %v263 = vsel %vm184, %v262, %v254
      %v264 = vrot.slane %v256, 6
      %v265 = vsel %vm187, %v264, %v263
      %v266 = vrot.slane %v257, 5
      %v267 = vsel %vm190, %v266, %v265
      %268 = vrot.lane.b32.xlu0 %v267, 17
      %v269 = vpop.permute.xlu0 %268
      %vm271 = vcmask 150672
      %272 = vst.msk [vmem:[#allocation2] sm:$0xf] %vm271, %v269
      %v273 = vld [vmem:[%s165] sm:$0x1]
      %v274 = vld [vmem:[%s165 + $0x10] sm:$0x1]
      %v275 = vld [vmem:[%s165 + $0x20] sm:$0x1]
      %v276 = vld [vmem:[%s165 + $0x30] sm:$0x1]
      %v281 = vrot.slane %v274, 7
      %v282 = vsel %vm184, %v281, %v273
      %v283 = vrot.slane %v275, 6
      %v284 = vsel %vm187, %v283, %v282
      %v285 = vrot.slane %v276, 5
      %v286 = vsel %vm190, %v285, %v284
      %287 = vrot.lane.b32.xlu0 %v286, 21
      %v288 = vpop.permute.xlu0 %287
      %vm290 = vcmask 290072
      %291 = vst.msk [vmem:[#allocation2] sm:$0xf] %vm290, %v288
      %v292 = vld [vmem:[%s165 + $0x1] sm:$0x1]
      %v293 = vld [vmem:[%s165 + $0x11] sm:$0x1]
      %v294 = vld [vmem:[%s165 + $0x21] sm:$0x1]
      %v295 = vld [vmem:[%s165 + $0x31] sm:$0x1]
      %v300 = vrot.slane %v293, 7
      %v301 = vsel %vm184, %v300, %v292
      %v302 = vrot.slane %v294, 6
      %v303 = vsel %vm187, %v302, %v301
      %v304 = vrot.slane %v295, 5
      %v305 = vsel %vm190, %v304, %v303
      %306 = vrot.lane.b32.xlu0 %v305, 37
      %v307 = vpop.permute.xlu0 %306
      %vm309 = vcmask 429352
      %310 = vst.msk [vmem:[#allocation2] sm:$0xf] %vm309, %v307
      %v311 = vld [vmem:[%s165 + $0x1] sm:$0x1]
      %v312 = vld [vmem:[%s165 + $0x11] sm:$0x1]
      %v313 = vld [vmem:[%s165 + $0x21] sm:$0x1]
      %v314 = vld [vmem:[%s165 + $0x31] sm:$0x1]
      %v319 = vrot.slane %v312, 7
      %v320 = vsel %vm184, %v319, %v311
      %v321 = vrot.slane %v313, 6
      %v322 = vsel %vm187, %v321, %v320
      %v323 = vrot.slane %v314, 5
      %v324 = vsel %vm190, %v323, %v322
      %325 = vrot.lane.b32.xlu0 %v324, 35
      %v326 = vpop.permute.xlu0 %325
      %vm328 = vcmask 298272
      %329 = vst.msk [vmem:[#allocation2] sm:$0xf] %vm328, %v326
      %v330 = vld [vmem:[%s165 + $0x1] sm:$0x1]
      %v331 = vld [vmem:[%s165 + $0x11] sm:$0x1]
      %v332 = vld [vmem:[%s165 + $0x21] sm:$0x1]
      %v333 = vld [vmem:[%s165 + $0x31] sm:$0x1]
      %v338 = vrot.slane %v331, 7
      %v339 = vsel %vm184, %v338, %v330
      %v340 = vrot.slane %v332, 6
      %v341 = vsel %vm187, %v340, %v339
      %v342 = vrot.slane %v333, 5
      %v343 = vsel %vm190, %v342, %v341
      %344 = vrot.lane.b32.xlu0 %v343, 39
      %v345 = vpop.permute.xlu0 %344
      %vm347 = vcmask 437672
      %348 = vst.msk [vmem:[#allocation2] sm:$0xf] %vm347, %v345
      %v349 = vld [vmem:[%s165 + $0x2] sm:$0x1]
      %v350 = vld [vmem:[%s165 + $0x12] sm:$0x1]
      %v351 = vld [vmem:[%s165 + $0x22] sm:$0x1]
      %v352 = vld [vmem:[%s165 + $0x32] sm:$0x1]
      %v357 = vrot.slane %v350, 7
      %v358 = vsel %vm184, %v357, %v349
      %v359 = vrot.slane %v351, 6
      %v360 = vsel %vm187, %v359, %v358
      %v361 = vrot.slane %v352, 5
      %v362 = vsel %vm190, %v361, %v360
      %363 = vrot.lane.b32.xlu0 %v362, 55
      %v364 = vpop.permute.xlu0 %363
      %vm366 = vcmask 576952
      %367 = vst.msk [vmem:[#allocation2] sm:$0xf] %vm366, %v364
      %v368 = vld [vmem:[%s165 + $0x2] sm:$0x1]
      %v369 = vld [vmem:[%s165 + $0x12] sm:$0x1]
      %v370 = vld [vmem:[%s165 + $0x22] sm:$0x1]
      %v371 = vld [vmem:[%s165 + $0x32] sm:$0x1]
      %v376 = vrot.slane %v369, 7
      %v377 = vsel %vm184, %v376, %v368
      %v378 = vrot.slane %v370, 6
      %v379 = vsel %vm187, %v378, %v377
      %v380 = vrot.slane %v371, 5
      %v381 = vsel %vm190, %v380, %v379
      %382 = vrot.lane.b32.xlu0 %v381, 53
      %v383 = vpop.permute.xlu0 %382
      %vm385 = vcmask 445872
      %386 = vst.msk [vmem:[#allocation2] sm:$0xf] %vm385, %v383
      %v387 = vld [vmem:[%s165 + $0x2] sm:$0x1]
      %v388 = vld [vmem:[%s165 + $0x12] sm:$0x1]
      %v389 = vld [vmem:[%s165 + $0x22] sm:$0x1]
      %v390 = vld [vmem:[%s165 + $0x32] sm:$0x1]
      %v395 = vrot.slane %v388, 7
      %v396 = vsel %vm184, %v395, %v387
      %v397 = vrot.slane %v389, 6
      %v398 = vsel %vm187, %v397, %v396
      %v399 = vrot.slane %v390, 5
      %v400 = vsel %vm190, %v399, %v398
      %401 = vrot.lane.b32.xlu0 %v400, 57
      %v402 = vpop.permute.xlu0 %401
      %vm404 = vcmask 585272
      %405 = vst.msk [vmem:[#allocation2] sm:$0xf] %vm404, %v402
      %v406 = vld [vmem:[%s165 + $0x3] sm:$0x1]
      %v407 = vld [vmem:[%s165 + $0x13] sm:$0x1]
      %v408 = vld [vmem:[%s165 + $0x23] sm:$0x1]
      %v409 = vld [vmem:[%s165 + $0x33] sm:$0x1]
      %v414 = vrot.slane %v407, 7
      %v415 = vsel %vm184, %v414, %v406
      %v416 = vrot.slane %v408, 6
      %v417 = vsel %vm187, %v416, %v415
      %v418 = vrot.slane %v409, 5
      %v419 = vsel %vm190, %v418, %v417
      %420 = vrot.lane.b32.xlu0 %v419, 73
      %v421 = vpop.permute.xlu0 %420
      %vm423 = vcmask 724552
      %424 = vst.msk [vmem:[#allocation2] sm:$0xf] %vm423, %v421
      %v425 = vld [vmem:[%s165 + $0x3] sm:$0x1]
      %v426 = vld [vmem:[%s165 + $0x13] sm:$0x1]
      %v427 = vld [vmem:[%s165 + $0x23] sm:$0x1]
      %v428 = vld [vmem:[%s165 + $0x33] sm:$0x1]
      %v433 = vrot.slane %v426, 7
      %v434 = vsel %vm184, %v433, %v425
      %v435 = vrot.slane %v427, 6
      %v436 = vsel %vm187, %v435, %v434
      %v437 = vrot.slane %v428, 5
      %v438 = vsel %vm190, %v437, %v436
      %439 = vrot.lane.b32.xlu0 %v438, 71
      %v440 = vpop.permute.xlu0 %439
      %vm442 = vcmask 593472
      %443 = vst.msk [vmem:[#allocation2] sm:$0xf] %vm442, %v440
      %v444 = vld [vmem:[%s165 + $0x3] sm:$0x1]
      %v445 = vld [vmem:[%s165 + $0x13] sm:$0x1]
      %v446 = vld [vmem:[%s165 + $0x23] sm:$0x1]
      %v447 = vld [vmem:[%s165 + $0x33] sm:$0x1]
      %v452 = vrot.slane %v445, 7
      %v453 = vsel %vm184, %v452, %v444
      %v454 = vrot.slane %v446, 6
      %v455 = vsel %vm187, %v454, %v453
      %v456 = vrot.slane %v447, 5
      %v457 = vsel %vm190, %v456, %v455
      %458 = vrot.lane.b32.xlu0 %v457, 75
      %v459 = vpop.permute.xlu0 %458
      %vm461 = vcmask 732872
      %462 = vst.msk [vmem:[#allocation2] sm:$0xf] %vm461, %v459
      %v463 = vld [vmem:[%s165 + $0x4] sm:$0x1]
      %v464 = vld [vmem:[%s165 + $0x14] sm:$0x1]
      %v465 = vld [vmem:[%s165 + $0x24] sm:$0x1]
      %v466 = vld [vmem:[%s165 + $0x34] sm:$0x1]
      %v471 = vrot.slane %v464, 7
      %v472 = vsel %vm184, %v471, %v463
      %v473 = vrot.slane %v465, 6
      %v474 = vsel %vm187, %v473, %v472
      %v475 = vrot.slane %v466, 5
      %v476 = vsel %vm190, %v475, %v474
      %477 = vrot.lane.b32.xlu0 %v476, 91
      %v478 = vpop.permute.xlu0 %477
      %vm480 = vcmask 872152
      %481 = vst.msk [vmem:[#allocation2] sm:$0xf] %vm480, %v478
      %v482 = vld [vmem:[%s165 + $0x4] sm:$0x1]
      %v483 = vld [vmem:[%s165 + $0x14] sm:$0x1]
      %v484 = vld [vmem:[%s165 + $0x24] sm:$0x1]
      %v485 = vld [vmem:[%s165 + $0x34] sm:$0x1]
      %v490 = vrot.slane %v483, 7
      %v491 = vsel %vm184, %v490, %v482
      %v492 = vrot.slane %v484, 6
      %v493 = vsel %vm187, %v492, %v491
      %v494 = vrot.slane %v485, 5
      %v495 = vsel %vm190, %v494, %v493
      %496 = vrot.lane.b32.xlu0 %v495, 89
      %v497 = vpop.permute.xlu0 %496
      %vm499 = vcmask 741072
      %500 = vst.msk [vmem:[#allocation2] sm:$0xf] %vm499, %v497
      %v501 = vld [vmem:[%s165 + $0x4] sm:$0x1]
      %v502 = vld [vmem:[%s165 + $0x14] sm:$0x1]
      %v503 = vld [vmem:[%s165 + $0x24] sm:$0x1]
      %v504 = vld [vmem:[%s165 + $0x34] sm:$0x1]
      %v509 = vrot.slane %v502, 7
      %v510 = vsel %vm184, %v509, %v501
      %v511 = vrot.slane %v503, 6
      %v512 = vsel %vm187, %v511, %v510
      %v513 = vrot.slane %v504, 5
      %v514 = vsel %vm190, %v513, %v512
      %515 = vrot.lane.b32.xlu0 %v514, 93
      %v516 = vpop.permute.xlu0 %515
      %vm518 = vcmask 880472
      %519 = vst.msk [vmem:[#allocation2] sm:$0xf] %vm518, %v516
      %v520 = vld [vmem:[%s165 + $0x5] sm:$0x1]
      %v521 = vld [vmem:[%s165 + $0x15] sm:$0x1]
      %v522 = vld [vmem:[%s165 + $0x25] sm:$0x1]
      %v523 = vld [vmem:[%s165 + $0x35] sm:$0x1]
      %v528 = vrot.slane %v521, 7
      %v529 = vsel %vm184, %v528, %v520
      %v530 = vrot.slane %v522, 6
      %v531 = vsel %vm187, %v530, %v529
      %v532 = vrot.slane %v523, 5
      %v533 = vsel %vm190, %v532, %v531
      %534 = vrot.lane.b32.xlu0 %v533, 109
      %v535 = vpop.permute.xlu0 %534
      %vm537 = vcmask 1019752
      %538 = vst.msk [vmem:[#allocation2] sm:$0xf] %vm537, %v535
      %v539 = vld [vmem:[%s165 + $0x5] sm:$0x1]
      %v540 = vld [vmem:[%s165 + $0x15] sm:$0x1]
      %v541 = vld [vmem:[%s165 + $0x25] sm:$0x1]
      %v542 = vld [vmem:[%s165 + $0x35] sm:$0x1]
      %v547 = vrot.slane %v540, 7
      %v548 = vsel %vm184, %v547, %v539
      %v549 = vrot.slane %v541, 6
      %v550 = vsel %vm187, %v549, %v548
      %v551 = vrot.slane %v542, 5
      %v552 = vsel %vm190, %v551, %v550
      %553 = vrot.lane.b32.xlu0 %v552, 107
      %v554 = vpop.permute.xlu0 %553
      %vm556 = vcmask 888672
      %557 = vst.msk [vmem:[#allocation2] sm:$0xf] %vm556, %v554
      %v558 = vld [vmem:[%s165 + $0x5] sm:$0x1]
      %v559 = vld [vmem:[%s165 + $0x15] sm:$0x1]
      %v560 = vld [vmem:[%s165 + $0x25] sm:$0x1]
      %v561 = vld [vmem:[%s165 + $0x35] sm:$0x1]
      %v566 = vrot.slane %v559, 7
      %v567 = vsel %vm184, %v566, %v558
      %v568 = vrot.slane %v560, 6
      %v569 = vsel %vm187, %v568, %v567
      %v570 = vrot.slane %v561, 5
      %v571 = vsel %vm190, %v570, %v569
      %572 = vrot.lane.b32.xlu0 %v571, 111
      %v573 = vpop.permute.xlu0 %572
      %vm575 = vcmask 1028072
      %576 = vst.msk [vmem:[#allocation2] sm:$0xf] %vm575, %v573
      %v577 = vld [vmem:[%s165 + $0x6] sm:$0x1]
      %v578 = vld [vmem:[%s165 + $0x16] sm:$0x1]
      %v579 = vld [vmem:[%s165 + $0x26] sm:$0x1]
      %v580 = vld [vmem:[%s165 + $0x36] sm:$0x1]
      %v585 = vrot.slane %v578, 7
      %v586 = vsel %vm184, %v585, %v577
      %v587 = vrot.slane %v579, 6
      %v588 = vsel %vm187, %v587, %v586
      %v589 = vrot.slane %v580, 5
      %v590 = vsel %vm190, %v589, %v588
      %591 = vrot.lane.b32.xlu0 %v590, 127
      %v592 = vpop.permute.xlu0 %591
      %vm594 = vcmask 1044472
      %595 = vst.msk [vmem:[#allocation2] sm:$0xf] %vm594, %v592
      %vm596 = vcmask 117760
      %597 = vst.msk [vmem:[#allocation2 + $0x8] sm:$0xf] %vm596, %v592
      %v598 = vld [vmem:[%s165 + $0x6] sm:$0x1]
      %v599 = vld [vmem:[%s165 + $0x16] sm:$0x1]
      %v600 = vld [vmem:[%s165 + $0x26] sm:$0x1]
      %v601 = vld [vmem:[%s165 + $0x36] sm:$0x1]
      %v606 = vrot.slane %v599, 7
      %v607 = vsel %vm184, %v606, %v598
      %v608 = vrot.slane %v600, 6
      %v609 = vsel %vm187, %v608, %v607
      %v610 = vrot.slane %v601, 5
      %v611 = vsel %vm190, %v610, %v609
      %612 = vrot.lane.b32.xlu0 %v611, 125
      %v613 = vpop.permute.xlu0 %612
      %vm615 = vcmask 1036272
      %616 = vst.msk [vmem:[#allocation2] sm:$0xf] %vm615, %v613
      %v617 = vld [vmem:[%s165 + $0x6] sm:$0x1]
      %v618 = vld [vmem:[%s165 + $0x16] sm:$0x1]
      %v619 = vld [vmem:[%s165 + $0x26] sm:$0x1]
      %v620 = vld [vmem:[%s165 + $0x36] sm:$0x1]
      %v625 = vrot.slane %v618, 7
      %v626 = vsel %vm184, %v625, %v617
      %v627 = vrot.slane %v619, 6
      %v628 = vsel %vm187, %v627, %v626
      %v629 = vrot.slane %v620, 5
      %v630 = vsel %vm190, %v629, %v628
      %631 = vrot.lane.b32.xlu0 %v630, 1
      %v632 = vpop.permute.xlu0 %631
      %vm634 = vcmask 126072
      %635 = vst.msk [vmem:[#allocation2 + $0x8] sm:$0xf] %vm634, %v632
      %v636 = vld [vmem:[%s165 + $0x7] sm:$0x1]
      %v637 = vld [vmem:[%s165 + $0x17] sm:$0x1]
      %v638 = vld [vmem:[%s165 + $0x27] sm:$0x1]
      %v639 = vld [vmem:[%s165 + $0x37] sm:$0x1]
      %v644 = vrot.slane %v637, 7
      %v645 = vsel %vm184, %v644, %v636
      %v646 = vrot.slane %v638, 6
      %v647 = vsel %vm187, %v646, %v645
      %v648 = vrot.slane %v639, 5
      %v649 = vsel %vm190, %v648, %v647
      %650 = vrot.lane.b32.xlu0 %v649, 17
      %v651 = vpop.permute.xlu0 %650
      %vm653 = vcmask 265352
      %654 = vst.msk [vmem:[#allocation2 + $0x8] sm:$0xf] %vm653, %v651
      %v655 = vld [vmem:[%s165 + $0x7] sm:$0x1]
      %v656 = vld [vmem:[%s165 + $0x17] sm:$0x1]
      %v657 = vld [vmem:[%s165 + $0x27] sm:$0x1]
      %v658 = vld [vmem:[%s165 + $0x37] sm:$0x1]
      %v663 = vrot.slane %v656, 7
      %v664 = vsel %vm184, %v663, %v655
      %v665 = vrot.slane %v657, 6
      %v666 = vsel %vm187, %v665, %v664
      %v667 = vrot.slane %v658, 5
      %v668 = vsel %vm190, %v667, %v666
      %669 = vrot.lane.b32.xlu0 %v668, 15
      %v670 = vpop.permute.xlu0 %669
      %vm672 = vcmask 134272
      %673 = vst.msk [vmem:[#allocation2 + $0x8] sm:$0xf] %vm672, %v670
      %v674 = vld [vmem:[%s165 + $0x7] sm:$0x1]
      %v675 = vld [vmem:[%s165 + $0x17] sm:$0x1]
      %v676 = vld [vmem:[%s165 + $0x27] sm:$0x1]
      %v677 = vld [vmem:[%s165 + $0x37] sm:$0x1]
      %v682 = vrot.slane %v675, 7
      %v683 = vsel %vm184, %v682, %v674
      %v684 = vrot.slane %v676, 6
      %v685 = vsel %vm187, %v684, %v683
      %v686 = vrot.slane %v677, 5
      %v687 = vsel %vm190, %v686, %v685
      %688 = vrot.lane.b32.xlu0 %v687, 19
      %v689 = vpop.permute.xlu0 %688
      %vm691 = vcmask 273672
      %692 = vst.msk [vmem:[#allocation2 + $0x8] sm:$0xf] %vm691, %v689
      %v693 = vld [vmem:[%s165 + $0x8] sm:$0x1]
      %v694 = vld [vmem:[%s165 + $0x18] sm:$0x1]
      %v695 = vld [vmem:[%s165 + $0x28] sm:$0x1]
      %v696 = vld [vmem:[%s165 + $0x38] sm:$0x1]
      %v701 = vrot.slane %v694, 7
      %v702 = vsel %vm184, %v701, %v693
      %v703 = vrot.slane %v695, 6
      %v704 = vsel %vm187, %v703, %v702
      %v705 = vrot.slane %v696, 5
      %v706 = vsel %vm190, %v705, %v704
      %707 = vrot.lane.b32.xlu0 %v706, 35
      %v708 = vpop.permute.xlu0 %707
      %vm710 = vcmask 412952
      %711 = vst.msk [vmem:[#allocation2 + $0x8] sm:$0xf] %vm710, %v708
      %v712 = vld [vmem:[%s165 + $0x8] sm:$0x1]
      %v713 = vld [vmem:[%s165 + $0x18] sm:$0x1]
      %v714 = vld [vmem:[%s165 + $0x28] sm:$0x1]
      %v715 = vld [vmem:[%s165 + $0x38] sm:$0x1]
      %v720 = vrot.slane %v713, 7
      %v721 = vsel %vm184, %v720, %v712
      %v722 = vrot.slane %v714, 6
      %v723 = vsel %vm187, %v722, %v721
      %v724 = vrot.slane %v715, 5
      %v725 = vsel %vm190, %v724, %v723
      %726 = vrot.lane.b32.xlu0 %v725, 33
      %v727 = vpop.permute.xlu0 %726
      %vm729 = vcmask 281872
      %730 = vst.msk [vmem:[#allocation2 + $0x8] sm:$0xf] %vm729, %v727
      %v731 = vld [vmem:[%s165 + $0x8] sm:$0x1]
      %v732 = vld [vmem:[%s165 + $0x18] sm:$0x1]
      %v733 = vld [vmem:[%s165 + $0x28] sm:$0x1]
      %v734 = vld [vmem:[%s165 + $0x38] sm:$0x1]
      %v739 = vrot.slane %v732, 7
      %v740 = vsel %vm184, %v739, %v731
      %v741 = vrot.slane %v733, 6
      %v742 = vsel %vm187, %v741, %v740
      %v743 = vrot.slane %v734, 5
      %v744 = vsel %vm190, %v743, %v742
      %745 = vrot.lane.b32.xlu0 %v744, 37
      %v746 = vpop.permute.xlu0 %745
      %vm748 = vcmask 421272
      %749 = vst.msk [vmem:[#allocation2 + $0x8] sm:$0xf] %vm748, %v746
      %v750 = vld [vmem:[%s165 + $0x9] sm:$0x1]
      %v751 = vld [vmem:[%s165 + $0x19] sm:$0x1]
      %v752 = vld [vmem:[%s165 + $0x29] sm:$0x1]
      %v753 = vld [vmem:[%s165 + $0x39] sm:$0x1]
      %v758 = vrot.slane %v751, 7
      %v759 = vsel %vm184, %v758, %v750
      %v760 = vrot.slane %v752, 6
      %v761 = vsel %vm187, %v760, %v759
      %v762 = vrot.slane %v753, 5
      %v763 = vsel %vm190, %v762, %v761
      %764 = vrot.lane.b32.xlu0 %v763, 53
      %v765 = vpop.permute.xlu0 %764
      %vm767 = vcmask 560552
      %768 = vst.msk [vmem:[#allocation2 + $0x8] sm:$0xf] %vm767, %v765
      %v769 = vld [vmem:[%s165 + $0x9] sm:$0x1]
      %v770 = vld [vmem:[%s165 + $0x19] sm:$0x1]
      %v771 = vld [vmem:[%s165 + $0x29] sm:$0x1]
      %v772 = vld [vmem:[%s165 + $0x39] sm:$0x1]
      %v777 = vrot.slane %v770, 7
      %v778 = vsel %vm184, %v777, %v769
      %v779 = vrot.slane %v771, 6
      %v780 = vsel %vm187, %v779, %v778
      %v781 = vrot.slane %v772, 5
      %v782 = vsel %vm190, %v781, %v780
      %783 = vrot.lane.b32.xlu0 %v782, 51
      %v784 = vpop.permute.xlu0 %783
      %vm786 = vcmask 429472
      %787 = vst.msk [vmem:[#allocation2 + $0x8] sm:$0xf] %vm786, %v784
      %v788 = vld [vmem:[%s165 + $0x9] sm:$0x1]
      %v789 = vld [vmem:[%s165 + $0x19] sm:$0x1]
      %v790 = vld [vmem:[%s165 + $0x29] sm:$0x1]
      %v791 = vld [vmem:[%s165 + $0x39] sm:$0x1]
      %v796 = vrot.slane %v789, 7
      %v797 = vsel %vm184, %v796, %v788
      %v798 = vrot.slane %v790, 6
      %v799 = vsel %vm187, %v798, %v797
      %v800 = vrot.slane %v791, 5
      %v801 = vsel %vm190, %v800, %v799
      %802 = vrot.lane.b32.xlu0 %v801, 55
      %v803 = vpop.permute.xlu0 %802
      %vm805 = vcmask 568872
      %806 = vst.msk [vmem:[#allocation2 + $0x8] sm:$0xf] %vm805, %v803
      %v807 = vld [vmem:[%s165 + $0xa] sm:$0x1]
      %v808 = vld [vmem:[%s165 + $0x1a] sm:$0x1]
      %v809 = vld [vmem:[%s165 + $0x2a] sm:$0x1]
      %v810 = vld [vmem:[%s165 + $0x3a] sm:$0x1]
      %v815 = vrot.slane %v808, 7
      %v816 = vsel %vm184, %v815, %v807
      %v817 = vrot.slane %v809, 6
      %v818 = vsel %vm187, %v817, %v816
      %v819 = vrot.slane %v810, 5
      %v820 = vsel %vm190, %v819, %v818
      %821 = vrot.lane.b32.xlu0 %v820, 71
      %v822 = vpop.permute.xlu0 %821
      %vm824 = vcmask 708152
      %825 = vst.msk [vmem:[#allocation2 + $0x8] sm:$0xf] %vm824, %v822
      %v826 = vld [vmem:[%s165 + $0xa] sm:$0x1]
      %v827 = vld [vmem:[%s165 + $0x1a] sm:$0x1]
      %v828 = vld [vmem:[%s165 + $0x2a] sm:$0x1]
      %v829 = vld [vmem:[%s165 + $0x3a] sm:$0x1]
      %v834 = vrot.slane %v827, 7
      %v835 = vsel %vm184, %v834, %v826
      %v836 = vrot.slane %v828, 6
      %v837 = vsel %vm187, %v836, %v835
      %v838 = vrot.slane %v829, 5
      %v839 = vsel %vm190, %v838, %v837
      %840 = vrot.lane.b32.xlu0 %v839, 69
      %v841 = vpop.permute.xlu0 %840
      %vm843 = vcmask 577072
      %844 = vst.msk [vmem:[#allocation2 + $0x8] sm:$0xf] %vm843, %v841
      %v845 = vld [vmem:[%s165 + $0xa] sm:$0x1]
      %v846 = vld [vmem:[%s165 + $0x1a] sm:$0x1]
      %v847 = vld [vmem:[%s165 + $0x2a] sm:$0x1]
      %v848 = vld [vmem:[%s165 + $0x3a] sm:$0x1]
      %v853 = vrot.slane %v846, 7
      %v854 = vsel %vm184, %v853, %v845
      %v855 = vrot.slane %v847, 6
      %v856 = vsel %vm187, %v855, %v854
      %v857 = vrot.slane %v848, 5
      %v858 = vsel %vm190, %v857, %v856
      %859 = vrot.lane.b32.xlu0 %v858, 73
      %v860 = vpop.permute.xlu0 %859
      %vm862 = vcmask 716472
      %863 = vst.msk [vmem:[#allocation2 + $0x8] sm:$0xf] %vm862, %v860
      %v864 = vld [vmem:[%s165 + $0xb] sm:$0x1]
      %v865 = vld [vmem:[%s165 + $0x1b] sm:$0x1]
      %v866 = vld [vmem:[%s165 + $0x2b] sm:$0x1]
      %v867 = vld [vmem:[%s165 + $0x3b] sm:$0x1]
      %v872 = vrot.slane %v865, 7
      %v873 = vsel %vm184, %v872, %v864
      %v874 = vrot.slane %v866, 6
      %v875 = vsel %vm187, %v874, %v873
      %v876 = vrot.slane %v867, 5
      %v877 = vsel %vm190, %v876, %v875
      %878 = vrot.lane.b32.xlu0 %v877, 89
      %v879 = vpop.permute.xlu0 %878
      %vm881 = vcmask 855752
      %882 = vst.msk [vmem:[#allocation2 + $0x8] sm:$0xf] %vm881, %v879
      %v883 = vld [vmem:[%s165 + $0xb] sm:$0x1]
      %v884 = vld [vmem:[%s165 + $0x1b] sm:$0x1]
      %v885 = vld [vmem:[%s165 + $0x2b] sm:$0x1]
      %v886 = vld [vmem:[%s165 + $0x3b] sm:$0x1]
      %v891 = vrot.slane %v884, 7
      %v892 = vsel %vm184, %v891, %v883
      %v893 = vrot.slane %v885, 6
      %v894 = vsel %vm187, %v893, %v892
      %v895 = vrot.slane %v886, 5
      %v896 = vsel %vm190, %v895, %v894
      %897 = vrot.lane.b32.xlu0 %v896, 87
      %v898 = vpop.permute.xlu0 %897
      %vm900 = vcmask 724672
      %901 = vst.msk [vmem:[#allocation2 + $0x8] sm:$0xf] %vm900, %v898
      %v902 = vld [vmem:[%s165 + $0xb] sm:$0x1]
      %v903 = vld [vmem:[%s165 + $0x1b] sm:$0x1]
      %v904 = vld [vmem:[%s165 + $0x2b] sm:$0x1]
      %v905 = vld [vmem:[%s165 + $0x3b] sm:$0x1]
      %v910 = vrot.slane %v903, 7
      %v911 = vsel %vm184, %v910, %v902
      %v912 = vrot.slane %v904, 6
      %v913 = vsel %vm187, %v912, %v911
      %v914 = vrot.slane %v905, 5
      %v915 = vsel %vm190, %v914, %v913
      %916 = vrot.lane.b32.xlu0 %v915, 91
      %v917 = vpop.permute.xlu0 %916
      %vm919 = vcmask 864072
      %920 = vst.msk [vmem:[#allocation2 + $0x8] sm:$0xf] %vm919, %v917
      %v921 = vld [vmem:[%s165 + $0xc] sm:$0x1]
      %v922 = vld [vmem:[%s165 + $0x1c] sm:$0x1]
      %v923 = vld [vmem:[%s165 + $0x2c] sm:$0x1]
      %v924 = vld [vmem:[%s165 + $0x3c] sm:$0x1]
      %v929 = vrot.slane %v922, 7
      %v930 = vsel %vm184, %v929, %v921
      %v931 = vrot.slane %v923, 6
      %v932 = vsel %vm187, %v931, %v930
      %v933 = vrot.slane %v924, 5
      %v934 = vsel %vm190, %v933, %v932
      %935 = vrot.lane.b32.xlu0 %v934, 107
      %v936 = vpop.permute.xlu0 %935
      %vm938 = vcmask 1003352
      %939 = vst.msk [vmem:[#allocation2 + $0x8] sm:$0xf] %vm938, %v936
      %v940 = vld [vmem:[%s165 + $0xc] sm:$0x1]
      %v941 = vld [vmem:[%s165 + $0x1c] sm:$0x1]
      %v942 = vld [vmem:[%s165 + $0x2c] sm:$0x1]
      %v943 = vld [vmem:[%s165 + $0x3c] sm:$0x1]
      %v948 = vrot.slane %v941, 7
      %v949 = vsel %vm184, %v948, %v940
      %v950 = vrot.slane %v942, 6
      %v951 = vsel %vm187, %v950, %v949
      %v952 = vrot.slane %v943, 5
      %v953 = vsel %vm190, %v952, %v951
      %954 = vrot.lane.b32.xlu0 %v953, 105
      %v955 = vpop.permute.xlu0 %954
      %vm957 = vcmask 872272
      %958 = vst.msk [vmem:[#allocation2 + $0x8] sm:$0xf] %vm957, %v955
      %v959 = vld [vmem:[%s165 + $0xc] sm:$0x1]
      %v960 = vld [vmem:[%s165 + $0x1c] sm:$0x1]
      %v961 = vld [vmem:[%s165 + $0x2c] sm:$0x1]
      %v962 = vld [vmem:[%s165 + $0x3c] sm:$0x1]
      %v967 = vrot.slane %v960, 7
      %v968 = vsel %vm184, %v967, %v959
      %v969 = vrot.slane %v961, 6
      %v970 = vsel %vm187, %v969, %v968
      %v971 = vrot.slane %v962, 5
      %v972 = vsel %vm190, %v971, %v970
      %973 = vrot.lane.b32.xlu0 %v972, 109
      %v974 = vpop.permute.xlu0 %973
      %vm976 = vcmask 1011672
      %977 = vst.msk [vmem:[#allocation2 + $0x8] sm:$0xf] %vm976, %v974
      %v978 = vld [vmem:[%s165 + $0xd] sm:$0x1]
      %v979 = vld [vmem:[%s165 + $0x1d] sm:$0x1]
      %v980 = vld [vmem:[%s165 + $0x2d] sm:$0x1]
      %v981 = vld [vmem:[%s165 + $0x3d] sm:$0x1]
      %v986 = vrot.slane %v979, 7
      %v987 = vsel %vm184, %v986, %v978
      %v988 = vrot.slane %v980, 6
      %v989 = vsel %vm187, %v988, %v987
      %v990 = vrot.slane %v981, 5
      %v991 = vsel %vm190, %v990, %v989
      %992 = vrot.lane.b32.xlu0 %v991, 125
      %v993 = vpop.permute.xlu0 %992
      %vm995 = vcmask 1044456
      %996 = vst.msk [vmem:[#allocation2 + $0x8] sm:$0xf] %vm995, %v993
      %vm997 = vcmask 101376
      %998 = vst.msk [vmem:[#allocation2 + $0x10] sm:$0xf] %vm997, %v993
      %v999 = vld [vmem:[%s165 + $0xd] sm:$0x1]
      %v1000 = vld [vmem:[%s165 + $0x1d] sm:$0x1]
      %v1001 = vld [vmem:[%s165 + $0x2d] sm:$0x1]
      %v1002 = vld [vmem:[%s165 + $0x3d] sm:$0x1]
      %v1007 = vrot.slane %v1000, 7
      %v1008 = vsel %vm184, %v1007, %v999
      %v1009 = vrot.slane %v1001, 6
      %v1010 = vsel %vm187, %v1009, %v1008
      %v1011 = vrot.slane %v1002, 5
      %v1012 = vsel %vm190, %v1011, %v1010
      %1013 = vrot.lane.b32.xlu0 %v1012, 123
      %v1014 = vpop.permute.xlu0 %1013
      %vm1016 = vcmask 1019872
      %1017 = vst.msk [vmem:[#allocation2 + $0x8] sm:$0xf] %vm1016, %v1014
      %v1018 = vld [vmem:[%s165 + $0xd] sm:$0x1]
      %v1019 = vld [vmem:[%s165 + $0x1d] sm:$0x1]
      %v1020 = vld [vmem:[%s165 + $0x2d] sm:$0x1]
      %v1021 = vld [vmem:[%s165 + $0x3d] sm:$0x1]
      %v1026 = vrot.slane %v1019, 7
      %v1027 = vsel %vm184, %v1026, %v1018
      %v1028 = vrot.slane %v1020, 6
      %v1029 = vsel %vm187, %v1028, %v1027
      %v1030 = vrot.slane %v1021, 5
      %v1031 = vsel %vm190, %v1030, %v1029
      %1032 = vrot.lane.b32.xlu0 %v1031, 127
      %v1033 = vpop.permute.xlu0 %1032
      %vm1035 = vcmask 109672
      %1036 = vst.msk [vmem:[#allocation2 + $0x10] sm:$0xf] %vm1035, %v1033
      %v1037 = vld [vmem:[%s165 + $0xe] sm:$0x1]
      %v1038 = vld [vmem:[%s165 + $0x1e] sm:$0x1]
      %v1039 = vld [vmem:[%s165 + $0x2e] sm:$0x1]
      %v1040 = vld [vmem:[%s165 + $0x3e] sm:$0x1]
      %v1045 = vrot.slane %v1038, 7
      %v1046 = vsel %vm184, %v1045, %v1037
      %v1047 = vrot.slane %v1039, 6
      %v1048 = vsel %vm187, %v1047, %v1046
      %v1049 = vrot.slane %v1040, 5
      %v1050 = vsel %vm190, %v1049, %v1048
      %1051 = vrot.lane.b32.xlu0 %v1050, 15
      %v1052 = vpop.permute.xlu0 %1051
      %vm1054 = vcmask 248952
      %1055 = vst.msk [vmem:[#allocation2 + $0x10] sm:$0xf] %vm1054, %v1052
      %v1056 = vld [vmem:[%s165 + $0xe] sm:$0x1]
      %v1057 = vld [vmem:[%s165 + $0x1e] sm:$0x1]
      %v1058 = vld [vmem:[%s165 + $0x2e] sm:$0x1]
      %v1059 = vld [vmem:[%s165 + $0x3e] sm:$0x1]
      %v1064 = vrot.slane %v1057, 7
      %v1065 = vsel %vm184, %v1064, %v1056
      %v1066 = vrot.slane %v1058, 6
      %v1067 = vsel %vm187, %v1066, %v1065
      %v1068 = vrot.slane %v1059, 5
      %v1069 = vsel %vm190, %v1068, %v1067
      %1070 = vrot.lane.b32.xlu0 %v1069, 13
      %v1071 = vpop.permute.xlu0 %1070
      %vm1073 = vcmask 117872
      %1074 = vst.msk [vmem:[#allocation2 + $0x10] sm:$0xf] %vm1073, %v1071
      %v1075 = vld [vmem:[%s165 + $0xe] sm:$0x1]
      %v1076 = vld [vmem:[%s165 + $0x1e] sm:$0x1]
      %v1077 = vld [vmem:[%s165 + $0x2e] sm:$0x1]
      %v1078 = vld [vmem:[%s165 + $0x3e] sm:$0x1]
      %v1083 = vrot.slane %v1076, 7
      %v1084 = vsel %vm184, %v1083, %v1075
      %v1085 = vrot.slane %v1077, 6
      %v1086 = vsel %vm187, %v1085, %v1084
      %v1087 = vrot.slane %v1078, 5
      %v1088 = vsel %vm190, %v1087, %v1086
      %1089 = vrot.lane.b32.xlu0 %v1088, 17
      %v1090 = vpop.permute.xlu0 %1089
      %vm1092 = vcmask 257272
      %1093 = vst.msk [vmem:[#allocation2 + $0x10] sm:$0xf] %vm1092, %v1090
      %v1094 = vld [vmem:[%s165 + $0xf] sm:$0x1]
      %v1095 = vld [vmem:[%s165 + $0x1f] sm:$0x1]
      %v1096 = vld [vmem:[%s165 + $0x2f] sm:$0x1]
      %v1097 = vld [vmem:[%s165 + $0x3f] sm:$0x1]
      %v1102 = vrot.slane %v1095, 7
      %v1103 = vsel %vm184, %v1102, %v1094
      %v1104 = vrot.slane %v1096, 6
      %v1105 = vsel %vm187, %v1104, %v1103
      %v1106 = vrot.slane %v1097, 5
      %v1107 = vsel %vm190, %v1106, %v1105
      %1108 = vrot.lane.b32.xlu0 %v1107, 33
      %v1109 = vpop.permute.xlu0 %1108
      %vm1111 = vcmask 396552
      %1112 = vst.msk [vmem:[#allocation2 + $0x10] sm:$0xf] %vm1111, %v1109
      %v1113 = vld [vmem:[%s165 + $0xf] sm:$0x1]
      %v1114 = vld [vmem:[%s165 + $0x1f] sm:$0x1]
      %v1115 = vld [vmem:[%s165 + $0x2f] sm:$0x1]
      %v1116 = vld [vmem:[%s165 + $0x3f] sm:$0x1]
      %v1121 = vrot.slane %v1114, 7
      %v1122 = vsel %vm184, %v1121, %v1113
      %v1123 = vrot.slane %v1115, 6
      %v1124 = vsel %vm187, %v1123, %v1122
      %v1125 = vrot.slane %v1116, 5
      %v1126 = vsel %vm190, %v1125, %v1124
      %1127 = vrot.lane.b32.xlu0 %v1126, 31
      %v1128 = vpop.permute.xlu0 %1127
      %vm1130 = vcmask 265472
      %1131 = vst.msk [vmem:[#allocation2 + $0x10] sm:$0xf] %vm1130, %v1128
      %v1132 = vld [vmem:[%s165 + $0xf] sm:$0x1]
      %v1133 = vld [vmem:[%s165 + $0x1f] sm:$0x1]
      %v1134 = vld [vmem:[%s165 + $0x2f] sm:$0x1]
      %v1135 = vld [vmem:[%s165 + $0x3f] sm:$0x1]
      %v1140 = vrot.slane %v1133, 7
      %v1141 = vsel %vm184, %v1140, %v1132
      %v1142 = vrot.slane %v1134, 6
      %v1143 = vsel %vm187, %v1142, %v1141
      %v1144 = vrot.slane %v1135, 5
      %v1145 = vsel %vm190, %v1144, %v1143
      %1146 = vrot.lane.b32.xlu0 %v1145, 35
      %v1147 = vpop.permute.xlu0 %1146
      %vm1149 = vcmask 404872
      %1150 = vst.msk [vmem:[#allocation2 + $0x10] sm:$0xf] %vm1149, %v1147
      %v1151 = vld [vmem:[%s165 + $0xe] sm:$0x1]
      %v1152 = vld [vmem:[%s165 + $0x1e] sm:$0x1]
      %v1153 = vld [vmem:[%s165 + $0x2e] sm:$0x1]
      %v1154 = vld [vmem:[%s165 + $0x3e] sm:$0x1]
      %v1159 = vrot.slane %v1152, 7
      %v1160 = vsel %vm184, %v1159, %v1151
      %v1161 = vrot.slane %v1153, 6
      %v1162 = vsel %vm187, %v1161, %v1160
      %v1163 = vrot.slane %v1154, 5
      %v1164 = vsel %vm190, %v1163, %v1162
      %1165 = vrot.lane.b32.xlu0 %v1164, 51
      %v1166 = vpop.permute.xlu0 %1165
      %vm1168 = vcmask 544152
      %1169 = vst.msk [vmem:[#allocation2 + $0x10] sm:$0xf] %vm1168, %v1166
      %v1170 = vld [vmem:[%s165 + $0xe] sm:$0x1]
      %v1171 = vld [vmem:[%s165 + $0x1e] sm:$0x1]
      %v1172 = vld [vmem:[%s165 + $0x2e] sm:$0x1]
      %v1173 = vld [vmem:[%s165 + $0x3e] sm:$0x1]
      %v1178 = vrot.slane %v1171, 7
      %v1179 = vsel %vm184, %v1178, %v1170
      %v1180 = vrot.slane %v1172, 6
      %v1181 = vsel %vm187, %v1180, %v1179
      %v1182 = vrot.slane %v1173, 5
      %v1183 = vsel %vm190, %v1182, %v1181
      %1184 = vrot.lane.b32.xlu0 %v1183, 49
      %v1185 = vpop.permute.xlu0 %1184
      %vm1187 = vcmask 413072
      %1188 = vst.msk [vmem:[#allocation2 + $0x10] sm:$0xf] %vm1187, %v1185
      %v1189 = vld [vmem:[%s165 + $0xe] sm:$0x1]
      %v1190 = vld [vmem:[%s165 + $0x1e] sm:$0x1]
      %v1191 = vld [vmem:[%s165 + $0x2e] sm:$0x1]
      %v1192 = vld [vmem:[%s165 + $0x3e] sm:$0x1]
      %v1197 = vrot.slane %v1190, 7
      %v1198 = vsel %vm184, %v1197, %v1189
      %v1199 = vrot.slane %v1191, 6
      %v1200 = vsel %vm187, %v1199, %v1198
      %v1201 = vrot.slane %v1192, 5
      %v1202 = vsel %vm190, %v1201, %v1200
      %1203 = vrot.lane.b32.xlu0 %v1202, 53
      %v1204 = vpop.permute.xlu0 %1203
      %vm1206 = vcmask 552472
      %1207 = vst.msk [vmem:[#allocation2 + $0x10] sm:$0xf] %vm1206, %v1204
      %v1208 = vld [vmem:[#allocation2] sm:$0xff]
      %v1209 = vld [vmem:[#allocation2 + $0x8] sm:$0xff]
      %v1210 = vld [vmem:[#allocation2 + $0x10] sm:$0xff]
      %1211 = vst [vmem:[#allocation3] sm:$0xff] %v1208
      %1212 = vst [vmem:[#allocation3 + $0x8] sm:$0xff] %v1209
      %vm1213 = vcmask 261120
      %1214 = vst.msk [vmem:[#allocation3 + $0x10] sm:$0xff] %vm1213, %v1210
      %v1215 = vld [vmem:[#allocation2] sm:$0xff]
      %v1216 = vld [vmem:[#allocation2 + $0x8] sm:$0xff]
      %v1217 = vld [vmem:[#allocation2 + $0x10] sm:$0xff]
      %1221 = vrot.lane.b32.xlu0 %v1215, 127
      %v1222 = vpop.permute.xlu0 %1221
      %1223 = vrot.lane.b32.xlu0 %v1216, 127
      %v1224 = vpop.permute.xlu0 %1223
      %1225 = vrot.lane.b32.xlu0 %v1217, 127
      %v1226 = vpop.permute.xlu0 %1225
      %vm1227 = vcmask 1039360
      %v1228 = vsel %vm1227, %v1222, %v1224
      %v1229 = vsel %vm1227, %v1224, %v1226
      %1233 = vst [vmem:[#allocation3 + $0x18] sm:$0xff] %v1228
      %1234 = vst [vmem:[#allocation3 + $0x20] sm:$0xff] %v1229
      %1235 = vst.msk [vmem:[#allocation3 + $0x28] sm:$0xff] %vm1213, %v1226
      %v1236 = vld [vmem:[#allocation2] sm:$0xff]
      %v1237 = vld [vmem:[#allocation2 + $0x8] sm:$0xff]
      %v1238 = vld [vmem:[#allocation2 + $0x10] sm:$0xff]
      %1242 = vrot.lane.b32.xlu0 %v1236, 126
      %v1243 = vpop.permute.xlu0 %1242
      %1244 = vrot.lane.b32.xlu0 %v1237, 126
      %v1245 = vpop.permute.xlu0 %1244
      %1246 = vrot.lane.b32.xlu0 %v1238, 126
      %v1247 = vpop.permute.xlu0 %1246
      %vm1248 = vcmask 1031168
      %v1249 = vsel %vm1248, %v1243, %v1245
      %v1250 = vsel %vm1248, %v1245, %v1247
      %1254 = vst [vmem:[#allocation3 + $0x30] sm:$0xff] %v1249
      %1255 = vst [vmem:[#allocation3 + $0x38] sm:$0xff] %v1250
      %1256 = vst.msk [vmem:[#allocation3 + $0x40] sm:$0xff] %vm1213, %v1247
      %v1257 = vld [vmem:[#allocation2] sm:$0xff]
      %v1258 = vld [vmem:[#allocation2 + $0x8] sm:$0xff]
      %v1259 = vld [vmem:[#allocation2 + $0x10] sm:$0xff]
      %1263 = vrot.lane.b32.xlu0 %v1257, 110
      %v1264 = vpop.permute.xlu0 %1263
      %1265 = vrot.lane.b32.xlu0 %v1258, 110
      %v1266 = vpop.permute.xlu0 %1265
      %1267 = vrot.lane.b32.xlu0 %v1259, 110
      %v1268 = vpop.permute.xlu0 %1267
      %vm1269 = vcmask 900096
      %v1270 = vsel %vm1269, %v1264, %v1266
      %v1271 = vsel %vm1269, %v1266, %v1268
      %1275 = vst [vmem:[#allocation3 + $0x48] sm:$0xff] %v1270
      %1276 = vst [vmem:[#allocation3 + $0x50] sm:$0xff] %v1271
      %1277 = vst.msk [vmem:[#allocation3 + $0x58] sm:$0xff] %vm1213, %v1268
      %v1278 = vld [vmem:[#allocation2] sm:$0xff]
      %v1279 = vld [vmem:[#allocation2 + $0x8] sm:$0xff]
      %v1280 = vld [vmem:[#allocation2 + $0x10] sm:$0xff]
      %1284 = vrot.lane.b32.xlu0 %v1278, 109
      %v1285 = vpop.permute.xlu0 %1284
      %1286 = vrot.lane.b32.xlu0 %v1279, 109
      %v1287 = vpop.permute.xlu0 %1286
      %1288 = vrot.lane.b32.xlu0 %v1280, 109
      %v1289 = vpop.permute.xlu0 %1288
      %vm1290 = vcmask 891904
      %v1291 = vsel %vm1290, %v1285, %v1287
      %v1292 = vsel %vm1290, %v1287, %v1289
      %1296 = vst [vmem:[#allocation3 + $0x60] sm:$0xff] %v1291
      %1297 = vst [vmem:[#allocation3 + $0x68] sm:$0xff] %v1292
      %1298 = vst.msk [vmem:[#allocation3 + $0x70] sm:$0xff] %vm1213, %v1289
      %v1299 = vld [vmem:[#allocation2] sm:$0xff]
      %v1300 = vld [vmem:[#allocation2 + $0x8] sm:$0xff]
      %v1301 = vld [vmem:[#allocation2 + $0x10] sm:$0xff]
      %1305 = vrot.lane.b32.xlu0 %v1299, 108
      %v1306 = vpop.permute.xlu0 %1305
      %1307 = vrot.lane.b32.xlu0 %v1300, 108
      %v1308 = vpop.permute.xlu0 %1307
      %1309 = vrot.lane.b32.xlu0 %v1301, 108
      %v1310 = vpop.permute.xlu0 %1309
      %vm1311 = vcmask 883712
      %v1312 = vsel %vm1311, %v1306, %v1308
      %v1313 = vsel %vm1311, %v1308, %v1310
      %1317 = vst [vmem:[#allocation3 + $0x78] sm:$0xff] %v1312
      %1318 = vst [vmem:[#allocation3 + $0x80] sm:$0xff] %v1313
      %1319 = vst.msk [vmem:[#allocation3 + $0x88] sm:$0xff] %vm1213, %v1310
      %v1320 = vld [vmem:[#allocation2] sm:$0xff]
      %v1321 = vld [vmem:[#allocation2 + $0x8] sm:$0xff]
      %v1322 = vld [vmem:[#allocation2 + $0x10] sm:$0xff]
      %1326 = vrot.lane.b32.xlu0 %v1320, 92
      %v1327 = vpop.permute.xlu0 %1326
      %1328 = vrot.lane.b32.xlu0 %v1321, 92
      %v1329 = vpop.permute.xlu0 %1328
      %1330 = vrot.lane.b32.xlu0 %v1322, 92
      %v1331 = vpop.permute.xlu0 %1330
      %vm1332 = vcmask 752640
      %v1333 = vsel %vm1332, %v1327, %v1329
      %v1334 = vsel %vm1332, %v1329, %v1331
      %1338 = vst [vmem:[#allocation3 + $0x90] sm:$0xff] %v1333
      %1339 = vst [vmem:[#allocation3 + $0x98] sm:$0xff] %v1334
      %1340 = vst.msk [vmem:[#allocation3 + $0xa0] sm:$0xff] %vm1213, %v1331
      %v1341 = vld [vmem:[#allocation2] sm:$0xff]
      %v1342 = vld [vmem:[#allocation2 + $0x8] sm:$0xff]
      %v1343 = vld [vmem:[#allocation2 + $0x10] sm:$0xff]
      %1347 = vrot.lane.b32.xlu0 %v1341, 91
      %v1348 = vpop.permute.xlu0 %1347
      %1349 = vrot.lane.b32.xlu0 %v1342, 91
      %v1350 = vpop.permute.xlu0 %1349
      %1351 = vrot.lane.b32.xlu0 %v1343, 91
      %v1352 = vpop.permute.xlu0 %1351
      %vm1353 = vcmask 744448
      %v1354 = vsel %vm1353, %v1348, %v1350
      %v1355 = vsel %vm1353, %v1350, %v1352
      %1359 = vst [vmem:[#allocation3 + $0xa8] sm:$0xff] %v1354
      %1360 = vst [vmem:[#allocation3 + $0xb0] sm:$0xff] %v1355
      %1361 = vst.msk [vmem:[#allocation3 + $0xb8] sm:$0xff] %vm1213, %v1352
      %v1362 = vld [vmem:[#allocation2] sm:$0xff]
      %v1363 = vld [vmem:[#allocation2 + $0x8] sm:$0xff]
      %v1364 = vld [vmem:[#allocation2 + $0x10] sm:$0xff]
      %1368 = vrot.lane.b32.xlu0 %v1362, 90
      %v1369 = vpop.permute.xlu0 %1368
      %1370 = vrot.lane.b32.xlu0 %v1363, 90
      %v1371 = vpop.permute.xlu0 %1370
      %1372 = vrot.lane.b32.xlu0 %v1364, 90
      %v1373 = vpop.permute.xlu0 %1372
      %vm1374 = vcmask 736256
      %v1375 = vsel %vm1374, %v1369, %v1371
      %v1376 = vsel %vm1374, %v1371, %v1373
      %1380 = vst [vmem:[#allocation3 + $0xc0] sm:$0xff] %v1375
      %1381 = vst [vmem:[#allocation3 + $0xc8] sm:$0xff] %v1376
      %1382 = vst.msk [vmem:[#allocation3 + $0xd0] sm:$0xff] %vm1213, %v1373
      %v1383 = vld [vmem:[%s1] sm:$0xff]
      %v1384 = vld [vmem:[#allocation3] sm:$0xff]
      %v1385 = vld [vmem:[#allocation3 + $0x8] sm:$0xff]
      %v1386 = vld [vmem:[#allocation3 + $0x10] sm:$0xff]
      %v1387 = vld [vmem:[#allocation3 + $0x18] sm:$0xff]
      %v1388 = vld [vmem:[#allocation3 + $0x20] sm:$0xff]
      %v1389 = vld [vmem:[#allocation3 + $0x28] sm:$0xff]
      %v1390 = vld [vmem:[#allocation3 + $0x30] sm:$0xff]
      %v1391 = vld [vmem:[#allocation3 + $0x38] sm:$0xff]
      %v1392 = vld [vmem:[#allocation3 + $0x40] sm:$0xff]
      %v1393 = vld [vmem:[#allocation3 + $0x48] sm:$0xff]
      %v1394 = vld [vmem:[#allocation3 + $0x50] sm:$0xff]
      %v1395 = vld [vmem:[#allocation3 + $0x58] sm:$0xff]
      %v1396 = vld [vmem:[#allocation3 + $0x60] sm:$0xff]
      %v1397 = vld [vmem:[#allocation3 + $0x68] sm:$0xff]
      %v1398 = vld [vmem:[#allocation3 + $0x70] sm:$0xff]
      %v1399 = vld [vmem:[#allocation3 + $0x78] sm:$0xff]
      %v1400 = vld [vmem:[#allocation3 + $0x80] sm:$0xff]
      %v1401 = vld [vmem:[#allocation3 + $0x88] sm:$0xff]
      %v1402 = vld [vmem:[#allocation3 + $0x90] sm:$0xff]
      %v1403 = vld [vmem:[#allocation3 + $0x98] sm:$0xff]
      %v1404 = vld [vmem:[#allocation3 + $0xa0] sm:$0xff]
      %v1405 = vld [vmem:[#allocation3 + $0xa8] sm:$0xff]
      %v1406 = vld [vmem:[#allocation3 + $0xb0] sm:$0xff]
      %v1407 = vld [vmem:[#allocation3 + $0xb8] sm:$0xff]
      %v1408 = vld [vmem:[#allocation3 + $0xc0] sm:$0xff]
      %v1409 = vld [vmem:[#allocation3 + $0xc8] sm:$0xff]
      %v1410 = vld [vmem:[#allocation3 + $0xd0] sm:$0xff]
      %v1411 = vld [vmem:[%s2] sm:$0xff]
      %1413 = vset.pattern.permute.xlu0 0
      %1414 = vperm.xlu0 %1413, %v1411
      %v1415 = vpop.permute.xlu0 %1414
      %vm1417 = vcmask 588800
      %v1419 = vsel %vm1417, %v1383, 0
      %1421 = vmatprep.subr.mxu0 %v1385
      %1422 = vmatpush1.msra.mxu0 %v1384
      %1423 = vmatprep.subr.mxu0 %v1388
      %1424 = vmatpush1.msra.mxu0 %v1387
      %1425 = vmatprep.subr.mxu0 %v1391
      %1426 = vmatpush1.msra.mxu0 %v1390
      %1427 = vmatprep.subr.mxu0 %v1394
      %1428 = vmatpush1.msra.mxu0 %v1393
      %1429 = vmatprep.subr.mxu0 %v1397
      %1430 = vmatpush1.msra.mxu0 %v1396
      %1431 = vmatprep.subr.mxu0 %v1400
      %1432 = vmatpush1.msra.mxu0 %v1399
      %1433 = vmatprep.subr.mxu0 %v1403
      %1434 = vmatpush1.msra.mxu0 %v1402
      %1435 = vmatprep.subr.mxu0 %v1406
      %1436 = vmatpush1.msra.mxu0 %v1405
      %1437 = vmatprep.subr.mxu0 %v1409
      %1438 = vmatpush1.msra.mxu0 %v1408
      %1439 = vmatprep.subr.mxu0 0.0
      %1440 = vmatpush1.msra.mxu0 0.0
      %1441 = vmatprep.subr.mxu0 0.0
      %1442 = vmatpush1.msra.mxu0 0.0
      %1443 = vmatprep.subr.mxu0 0.0
      %1444 = vmatpush1.msra.mxu0 0.0
      %1445 = vmatprep.subr.mxu0 0.0
      %1446 = vmatpush1.msra.mxu0 0.0
      %1447 = vmatprep.subr.mxu0 0.0
      %1448 = vmatpush1.msra.mxu0 0.0
      %1449 = vmatprep.subr.mxu0 0.0
      %1450 = vmatpush1.msra.mxu0 0.0
      %1451 = vmatprep.subr.mxu0 0.0
      %1452 = vmatpush1.msra.mxu0 0.0
      %1453 = vmatprep.subr.mxu0 0.0
      %1454 = vmatpush1.msra.mxu0 0.0
      %1455 = vmatprep.subr.mxu0 0.0
      %1456 = vmatpush1.msra.mxu0 0.0
      %1457 = vmatprep.subr.mxu0 0.0
      %1458 = vmatpush1.msra.mxu0 0.0
      %1459 = vmatprep.subr.mxu0 0.0
      %1460 = vmatpush1.msra.mxu0 0.0
      %1461 = vmatprep.subr.mxu0 0.0
      %1462 = vmatpush1.msra.mxu0 0.0
      %1463 = vmatprep.subr.mxu0 0.0
      %1464 = vmatpush1.msra.mxu0 0.0
      %1465 = vmatprep.subr.mxu0 0.0
      %1466 = vmatpush1.msra.mxu0 0.0
      %1467 = vmatprep.subr.mxu0 0.0
      %1468 = vmatpush1.msra.mxu0 0.0
      %1469 = vmatprep.subr.mxu0 0.0
      %1470 = vmatpush1.msra.mxu0 0.0
      %1471 = vmatprep.subr.mxu0 0.0
      %1472 = vmatpush1.msra.mxu0 0.0
      %1473 = vmatprep.subr.mxu0 0.0
      %1474 = vmatpush1.msra.mxu0 0.0
      %1475 = vmatprep.subr.mxu0 0.0
      %1476 = vmatpush1.msra.mxu0 0.0
      %1477 = vmatprep.subr.mxu0 0.0
      %1478 = vmatpush1.msra.mxu0 0.0
      %1479 = vmatprep.subr.mxu0 0.0
      %1480 = vmatpush1.msra.mxu0 0.0
      %1481 = vmatprep.subr.mxu0 0.0
      %1482 = vmatpush1.msra.mxu0 0.0
      %1483 = vmatprep.subr.mxu0 0.0
      %1484 = vmatpush1.msra.mxu0 0.0
      %1485 = vmatprep.mubr.f32.mxu0 0.0
      %1486 = vmatmul.mubr.f32.gmra.mrb[0].mxu0 %v1419
      %v1487 = vpop.f32.mrb[0].mxu0
      %v1488 = vadd.f32 %v1415, %v1487
      %v1489 = vpop.f32.mrb[0].mxu0
      %v1490 = vadd.f32 %v1415, %v1489
      %1491 = vdwg.mxu0
      %1492 = vmatprep.subr.mxu0 0.0
      %1493 = vmatpush1.msra.mxu0 %v1386
      %1494 = vmatprep.subr.mxu0 0.0
      %1495 = vmatpush1.msra.mxu0 %v1389
      %1496 = vmatprep.subr.mxu0 0.0
      %1497 = vmatpush1.msra.mxu0 %v1392
      %1498 = vmatprep.subr.mxu0 0.0
      %1499 = vmatpush1.msra.mxu0 %v1395
      %1500 = vmatprep.subr.mxu0 0.0
      %1501 = vmatpush1.msra.mxu0 %v1398
      %1502 = vmatprep.subr.mxu0 0.0
      %1503 = vmatpush1.msra.mxu0 %v1401
      %1504 = vmatprep.subr.mxu0 0.0
      %1505 = vmatpush1.msra.mxu0 %v1404
      %1506 = vmatprep.subr.mxu0 0.0
      %1507 = vmatpush1.msra.mxu0 %v1407
      %1508 = vmatprep.subr.mxu0 0.0
      %1509 = vmatpush1.msra.mxu0 %v1410
      %1510 = vmatprep.subr.mxu0 0.0
      %1511 = vmatpush1.msra.mxu0 0.0
      %1512 = vmatprep.subr.mxu0 0.0
      %1513 = vmatpush1.msra.mxu0 0.0
      %1514 = vmatprep.subr.mxu0 0.0
      %1515 = vmatpush1.msra.mxu0 0.0
      %1516 = vmatprep.subr.mxu0 0.0
      %1517 = vmatpush1.msra.mxu0 0.0
      %1518 = vmatprep.subr.mxu0 0.0
      %1519 = vmatpush1.msra.mxu0 0.0
      %1520 = vmatprep.subr.mxu0 0.0
      %1521 = vmatpush1.msra.mxu0 0.0
      %1522 = vmatprep.subr.mxu0 0.0
      %1523 = vmatpush1.msra.mxu0 0.0
      %1524 = vmatprep.subr.mxu0 0.0
      %1525 = vmatpush1.msra.mxu0 0.0
      %1526 = vmatprep.subr.mxu0 0.0
      %1527 = vmatpush1.msra.mxu0 0.0
      %1528 = vmatprep.subr.mxu0 0.0
      %1529 = vmatpush1.msra.mxu0 0.0
      %1530 = vmatprep.subr.mxu0 0.0
      %1531 = vmatpush1.msra.mxu0 0.0
      %1532 = vmatprep.subr.mxu0 0.0
      %1533 = vmatpush1.msra.mxu0 0.0
      %1534 = vmatprep.subr.mxu0 0.0
      %1535 = vmatpush1.msra.mxu0 0.0
      %1536 = vmatprep.subr.mxu0 0.0
      %1537 = vmatpush1.msra.mxu0 0.0
      %1538 = vmatprep.subr.mxu0 0.0
      %1539 = vmatpush1.msra.mxu0 0.0
      %1540 = vmatprep.subr.mxu0 0.0
      %1541 = vmatpush1.msra.mxu0 0.0
      %1542 = vmatprep.subr.mxu0 0.0
      %1543 = vmatpush1.msra.mxu0 0.0
      %1544 = vmatprep.subr.mxu0 0.0
      %1545 = vmatpush1.msra.mxu0 0.0
      %1546 = vmatprep.subr.mxu0 0.0
      %1547 = vmatpush1.msra.mxu0 0.0
      %1548 = vmatprep.subr.mxu0 0.0
      %1549 = vmatpush1.msra.mxu0 0.0
      %1550 = vmatprep.subr.mxu0 0.0
      %1551 = vmatpush1.msra.mxu0 0.0
      %1552 = vmatprep.subr.mxu0 0.0
      %1553 = vmatpush1.msra.mxu0 0.0
      %1554 = vmatprep.subr.mxu0 0.0
      %1555 = vmatpush1.msra.mxu0 0.0
      %1556 = vmatprep.mubr.f32.mxu0 0.0
      %1557 = vmatmul.mubr.f32.gmra.mrb[0].mxu0 %v1419
      %v1558 = vpop.f32.mrb[0].mxu0
      %v1559 = vadd.f32 %v1415, %v1558
      %v1560 = vpop.f32.mrb[0].mxu0
      %1561 = vdwg.mxu0
      %vm1562 = vcmp.ge.f32.partialorder %v1488, 0.0
      %vm1563 = vcmp.ge.f32.partialorder %v1490, 0.0
      %vm1564 = vcmp.ge.f32.partialorder %v1559, 0.0
      %v1565 = vmul.f32 %v1488, 0.01
      %v1566 = vmul.f32 %v1490, 0.01
      %v1567 = vmul.f32 %v1559, 0.01
      %v1568 = vsel %vm1562, %v1488, %v1565
      %v1569 = vsel %vm1563, %v1490, %v1566
      %v1570 = vsel %vm1564, %v1559, %v1567
      %1571 = vst [vmem:[#allocation4] sm:$0xff] %v1568
      %1572 = vst [vmem:[#allocation4 + $0x8] sm:$0xff] %v1569
      %1573 = vst.msk [vmem:[#allocation4 + $0x10] sm:$0xff] %vm1213, %v1570
      %v1574 = vld [vmem:[#allocation4] sm:$0xff]
      %v1575 = vpack.c.bf16 %v1574, %v1574
      %vm1576 = vcmask 125952
      %1577 = vst.msk [vmem:[%s170] sm:$0xf] %vm1576, %v1575
      %v1578 = vld [vmem:[#allocation4] sm:$0xff]
      %v1579 = vpack.c.bf16 %v1578, %v1578
      %v1581 = vunpack.c.l.b16 %v1579
      %v1582 = vpack.c.b16 %v1581, %v1581
      %1583 = vrot.lane.b32.xlu0 %v1582, 126
      %v1584 = vpop.permute.xlu0 %1583
      %vm1586 = vcmask 257152
      %1587 = vst.msk [vmem:[%s170] sm:$0xf] %vm1586, %v1584
      %v1588 = vld [vmem:[#allocation4] sm:$0xff]
      %v1589 = vpack.c.bf16 %v1588, %v1588
      %v1591 = vunpack.c.l.b16 %v1589
      %v1592 = vpack.c.b16 %v1591, %v1591
      %1593 = vrot.lane.b32.xlu0 %v1592, 124
      %v1594 = vpop.permute.xlu0 %1593
      %vm1596 = vcmask 388352
      %1597 = vst.msk [vmem:[%s170] sm:$0xf] %vm1596, %v1594
      %v1598 = vld [vmem:[#allocation4] sm:$0xff]
      %v1599 = vpack.c.bf16 %v1598, %v1598
      %v1601 = vunpack.c.l.b16 %v1599
      %v1602 = vpack.c.b16 %v1601, %v1601
      %1603 = vrot.lane.b32.xlu0 %v1602, 122
      %v1604 = vpop.permute.xlu0 %1603
      %vm1606 = vcmask 519552
      %1607 = vst.msk [vmem:[%s170] sm:$0xf] %vm1606, %v1604
      %v1608 = vld [vmem:[#allocation4] sm:$0xff]
      %v1609 = vpack.c.bf16 %v1608, %v1608
      %v1611 = vunpack.c.l.b16 %v1609
      %v1612 = vpack.c.b16 %v1611, %v1611
      %1613 = vrot.lane.b32.xlu0 %v1612, 120
      %v1614 = vpop.permute.xlu0 %1613
      %vm1616 = vcmask 650752
      %1617 = vst.msk [vmem:[%s170] sm:$0xf] %vm1616, %v1614
      %v1618 = vld [vmem:[#allocation4] sm:$0xff]
      %v1619 = vpack.c.bf16 %v1618, %v1618
      %v1621 = vunpack.c.l.b16 %v1619
      %v1622 = vpack.c.b16 %v1621, %v1621
      %1623 = vrot.lane.b32.xlu0 %v1622, 118
      %v1624 = vpop.permute.xlu0 %1623
      %vm1626 = vcmask 781952
      %1627 = vst.msk [vmem:[%s170] sm:$0xf] %vm1626, %v1624
      %v1628 = vld [vmem:[#allocation4] sm:$0xff]
      %v1629 = vpack.c.bf16 %v1628, %v1628
      %v1631 = vunpack.c.l.b16 %v1629
      %v1632 = vpack.c.b16 %v1631, %v1631
      %1633 = vrot.lane.b32.xlu0 %v1632, 116
      %v1634 = vpop.permute.xlu0 %1633
      %vm1636 = vcmask 913152
      %1637 = vst.msk [vmem:[%s170] sm:$0xf] %vm1636, %v1634
      %v1638 = vld [vmem:[#allocation4] sm:$0xff]
      %v1639 = vld [vmem:[#allocation4 + $0x8] sm:$0xff]
      %v1640 = vpack.c.bf16 %v1638, %v1638
      %v1641 = vpack.c.bf16 %v1639, %v1639
      %v1644 = vunpack.c.l.b16 %v1640
      %v1645 = vunpack.c.l.b16 %v1641
      %v1646 = vpack.c.b16 %v1645, %v1644
      %1647 = vrot.lane.b32.xlu0 %v1646, 114
      %v1648 = vpop.permute.xlu0 %1647
      %v1649 = vrot.slane %v1648, 4
      %vm1650 = vcmask 932864
      %v1651 = vsel %vm1650, %v1648, %v1649
      %vm1653 = vcmask 1044352
      %1654 = vst.msk [vmem:[%s170] sm:$0xf] %vm1653, %v1651
      %v1655 = vld [vmem:[#allocation4 + $0x8] sm:$0xff]
      %v1656 = vpack.c.bf16 %v1655, %v1655
      %v1658 = vunpack.c.l.b16 %v1656
      %v1659 = vpack.c.b16 %v1658, %v1658
      %1660 = vrot.lane.b32.xlu0 %v1659, 112
      %v1661 = vpop.permute.xlu0 %1660
      %1663 = vst.msk [vmem:[%s170 + $0x4] sm:$0xf] %vm1576, %v1661
      %v1664 = vld [vmem:[#allocation4 + $0x8] sm:$0xff]
      %v1665 = vpack.c.bf16 %v1664, %v1664
      %v1667 = vunpack.c.l.b16 %v1665
      %v1668 = vpack.c.b16 %v1667, %v1667
      %1669 = vrot.lane.b32.xlu0 %v1668, 110
      %v1670 = vpop.permute.xlu0 %1669
      %1672 = vst.msk [vmem:[%s170 + $0x4] sm:$0xf] %vm1586, %v1670
      %v1673 = vld [vmem:[#allocation4 + $0x8] sm:$0xff]
      %v1674 = vpack.c.bf16 %v1673, %v1673
      %v1676 = vunpack.c.l.b16 %v1674
      %v1677 = vpack.c.b16 %v1676, %v1676
      %1678 = vrot.lane.b32.xlu0 %v1677, 108
      %v1679 = vpop.permute.xlu0 %1678
      %1681 = vst.msk [vmem:[%s170 + $0x4] sm:$0xf] %vm1596, %v1679
      %v1682 = vld [vmem:[#allocation4 + $0x8] sm:$0xff]
      %v1683 = vpack.c.bf16 %v1682, %v1682
      %v1685 = vunpack.c.l.b16 %v1683
      %v1686 = vpack.c.b16 %v1685, %v1685
      %1687 = vrot.lane.b32.xlu0 %v1686, 106
      %v1688 = vpop.permute.xlu0 %1687
      %1690 = vst.msk [vmem:[%s170 + $0x4] sm:$0xf] %vm1606, %v1688
      %v1691 = vld [vmem:[#allocation4 + $0x8] sm:$0xff]
      %v1692 = vpack.c.bf16 %v1691, %v1691
      %v1694 = vunpack.c.l.b16 %v1692
      %v1695 = vpack.c.b16 %v1694, %v1694
      %1696 = vrot.lane.b32.xlu0 %v1695, 104
      %v1697 = vpop.permute.xlu0 %1696
      %1699 = vst.msk [vmem:[%s170 + $0x4] sm:$0xf] %vm1616, %v1697
      %v1700 = vld [vmem:[#allocation4 + $0x8] sm:$0xff]
      %v1701 = vpack.c.bf16 %v1700, %v1700
      %v1703 = vunpack.c.l.b16 %v1701
      %v1704 = vpack.c.b16 %v1703, %v1703
      %1705 = vrot.lane.b32.xlu0 %v1704, 102
      %v1706 = vpop.permute.xlu0 %1705
      %1708 = vst.msk [vmem:[%s170 + $0x4] sm:$0xf] %vm1626, %v1706
      %v1709 = vld [vmem:[#allocation4 + $0x8] sm:$0xff]
      %v1710 = vld [vmem:[#allocation4 + $0x10] sm:$0xff]
      %v1711 = vpack.c.bf16 %v1709, %v1709
      %v1712 = vpack.c.bf16 %v1710, %v1710
      %v1715 = vunpack.c.l.b16 %v1711
      %v1716 = vunpack.c.l.b16 %v1712
      %v1717 = vpack.c.b16 %v1716, %v1715
      %1718 = vrot.lane.b32.xlu0 %v1717, 100
      %v1719 = vpop.permute.xlu0 %1718
      %v1720 = vrot.slane %v1719, 4
      %vm1721 = vcmask 818176
      %v1722 = vsel %vm1721, %v1719, %v1720
      %1724 = vst.msk [vmem:[%s170 + $0x4] sm:$0xf] %vm1636, %v1722
      %v1725 = vld [vmem:[#allocation4 + $0x10] sm:$0xff]
      %v1726 = vpack.c.bf16 %v1725, %v1725
      %v1728 = vunpack.c.l.b16 %v1726
      %v1729 = vpack.c.b16 %v1728, %v1728
      %1730 = vrot.lane.b32.xlu0 %v1729, 98
      %v1731 = vpop.permute.xlu0 %1730
      %1733 = vst.msk [vmem:[%s170 + $0x4] sm:$0xf] %vm1653, %v1731
      %p1734 = scmp.lt.s32.totalorder %s14, 1
      %s1735 = scalar_select %p1734, %s14, 1
      %s1736 = smul.addr %s1735, 2
      %s1737 = smul.addr %s1736, 4
      %s1738 = scalar_lea.vmem %s3, %s1737
      // Predicated region
      $region33: #{convd_forward.1} parent=31 // pred_check
        %p1739 = pneg %p100
      $region34: #{convd_forward.1} parent=31 // pred_check_branch
        %1741 = sbr.rel (%p1739) target = $region36
      $region35: #{convd_forward.1} parent=31 // pred_region
        _
      $region36: #{convd_forward.1} parent=31 // pred_fallthru
        _
    $region32: #{convd_forward.1} parent=5 // pred_fallthru
      _
    %p1742 = scmp.le.s32.totalorder 2, %s9
    // Predicated region
    $region37: #{convd_forward.1} parent=5 // pred_check
      %p1743 = pneg %p1742
    $region38: #{convd_forward.1} parent=5 // pred_check_branch
      %1745 = sbr.rel (%p1743) target = $region40
    $region39: #{convd_forward.1} parent=5 // pred_region
      %s1746 = ssub.s32 %s9, 2
      // Predicated region
      $region41: #{convd_forward.1} parent=39 // pred_check
        %p1747 = pneg %p106
      $region42: #{convd_forward.1} parent=39 // pred_check_branch
        %1749 = sbr.rel (%p1747) target = $region44
      $region43: #{convd_forward.1} parent=39 // pred_region
        %p1750 = scmp.lt.s32.totalorder %s15, 1
        %s1751 = scalar_select %p1750, %s15, 1
        %s1752 = smul.addr %s1751, 2
        %s1753 = smul.addr %s1752, 4
        %s1754 = scalar_lea.vmem %s3, %s1753
      $region44: #{convd_forward.1} parent=39 // pred_fallthru
        _
    $region40: #{convd_forward.1} parent=5 // pred_fallthru
      _
  $region6: #{convd_forward.1} parent=0 // loop_footer
    %s13 = sadd.s32 1, %s9
  $region7: #{convd_forward.1} parent=0 // loop_footer_branch
    %8 = sbr.rel target = $region3
  $region8: #{convd_forward.1} parent=0 // loop_exit
    _

</llo_original>
